<compile_context>
chip_gen: v5e
topology: v5e:2x2
jax: 0.10.0
libtpu: 0.0.40
codegen_flags: <defaults>
</compile_context>

<pallas_src>
import math
import jax
import jax.numpy as jnp
from jax.experimental import pallas as pl
from jax.experimental.pallas import tpu as pltpu

# ----------------------- config (small, synthetic BERT) -----------------------
B, S, D = 2, 8, 128          # batch, seq, hidden
BS = B * S
NH, DH = 4, 32               # heads, head dim
FFN = 512                    # feed-forward width (4*D)
NUM_LAYERS = 2
VOCAB = 100
H_CLS = 30                   # classifier hidden (matches module: H = 30)
NUM_LABELS = 6               # matches module: num_labels = 6
CLS_PAD = 128                # lane-dense padding for classifier hidden/logits
NEG_INF = -1e9


# ------------------------------ shared helpers --------------------------------
def _layernorm(x, gamma, beta, eps=1e-12):
    mu = jnp.mean(x, axis=-1, keepdims=True)
    var = jnp.mean((x - mu) ** 2, axis=-1, keepdims=True)
    return (x - mu) * jax.lax.rsqrt(var + eps) * gamma + beta


# ------------------------------ fused kernel -----------------------------------
# One grid step = one encoder layer; classifier head fused into the last step.
def encoder_layer_kernel(x_ref, bias_ref, hmask_ref,
                         wqkv_ref, bqkv_ref, wo_ref, bo_ref, ln1g_ref, ln1b_ref,
                         w1_ref, b1_ref, w2_ref, b2_ref, ln2g_ref, ln2b_ref,
                         cw1_ref, cb1_ref, cw2_ref, cb2_ref,
                         out_ref, h_ref):
    l = pl.program_id(0)
    bf = jnp.bfloat16

    @pl.when(l == 0)
    def _():
        h_ref[...] = x_ref[...]          # load carried hidden state from input

    h = h_ref[...]                        # [BS, D] f32
    hb = h.astype(bf)

    # ---- fused QKV projection: single [BS,D] x [D,3D] MXU matmul -------------
    qkv = jnp.dot(hb, wqkv_ref[0], preferred_element_type=jnp.float32) + bqkv_ref[0]
    q = qkv[:, 0:D]                       # 1/sqrt(DH) already folded into wq/bq
    k = qkv[:, D:2 * D]
    v = qkv[:, 2 * D:3 * D]

    # ---- multi-head attention, batched over heads (heads stay in lanes) ------
    hmask = hmask_ref[...]                               # [NH, 1, D] one-hot lane mask
    qm = (q[None, :, :] * hmask).astype(bf)              # [NH, BS, D]
    kb = jnp.broadcast_to(k.astype(bf), (NH, BS, D))     # [NH, BS, D]
    vm = (v[None, :, :] * hmask).astype(bf)              # [NH, BS, D]

    s = jnp.einsum('hqd,hkd->hqk', qm, kb,
                   preferred_element_type=jnp.float32)   # [NH, BS, BS]
    s = s + bias_ref[...]                                # key padding + cross-batch block
    s = s - jnp.max(s, axis=-1, keepdims=True)
    p = jnp.exp(s)
    p = p * pl.reciprocal(jnp.sum(p, axis=-1, keepdims=True), approx=True)

    ctx4 = jnp.einsum('hqk,hkd->hqd', p.astype(bf), vm,
                      preferred_element_type=jnp.float32)  # [NH, BS, D]
    ctx = ctx4[0]
    for hh in range(1, NH):               # heads occupy disjoint lane blocks -> add == concat
        ctx = ctx + ctx4[hh]

    attn = jnp.dot(ctx.astype(bf), wo_ref[0],
                   preferred_element_type=jnp.float32) + bo_ref[0]
    h1 = _layernorm(h + attn, ln1g_ref[0], ln1b_ref[0])

    # ---- feed-forward ----------------------------------------------------------
    ff = jnp.dot(h1.astype(bf), w1_ref[0],
                 preferred_element_type=jnp.float32) + b1_ref[0]
    # TODO(synk): HF BERT uses exact erf GELU; tanh approximation used here.
    ff = jax.nn.gelu(ff)
    ff = jnp.dot(ff.astype(bf), w2_ref[0],
                 preferred_element_type=jnp.float32) + b2_ref[0]
    h_new = _layernorm(h1 + ff, ln2g_ref[0], ln2b_ref[0])
    h_ref[...] = h_new

    # ---- classifier head on CLS token, last layer only (dropouts = identity) --
    @pl.when(l == NUM_LAYERS - 1)
    def _():
        cls = h_new.reshape(B, S, D)[:, 0, :]                      # [B, D]
        hc = jnp.dot(cls.astype(bf), cw1_ref[...],
                     preferred_element_type=jnp.float32) + cb1_ref[...]
        hc = jnp.maximum(hc, 0.0)                                  # ReLU
        out_ref[...] = jnp.dot(hc.astype(bf), cw2_ref[...],
                               preferred_element_type=jnp.float32) + cb2_ref[...]


# ------------------------------- parameter init --------------------------------
def init_params(key):
    def nrm(k, shape, scale=0.02):
        return scale * jax.random.normal(k, shape, dtype=jnp.float32)

    keys = jax.random.split(key, 11)
    L = NUM_LAYERS
    return {
        "word_emb": nrm(keys[0], (VOCAB, D)),
        "pos_emb": nrm(keys[1], (S, D)),
        "type_emb": nrm(keys[2], (2, D)),
        "emb_ln_g": jnp.ones((1, 1, D), jnp.float32),
        "emb_ln_b": jnp.zeros((1, 1, D), jnp.float32),
        # per-layer encoder weights stacked on a leading layer axis
        "wq": nrm(keys[3], (L, D, D)), "bq": jnp.zeros((L, 1, D), jnp.float32),
        "wk": nrm(keys[4], (L, D, D)), "bk": jnp.zeros((L, 1, D), jnp.float32),
        "wv": nrm(keys[5], (L, D, D)), "bv": jnp.zeros((L, 1, D), jnp.float32),
        "wo": nrm(keys[6], (L, D, D)), "bo": jnp.zeros((L, 1, D), jnp.float32),
        "ln1_g": jnp.ones((L, 1, D), jnp.float32),
        "ln1_b": jnp.zeros((L, 1, D), jnp.float32),
        "w1": nrm(keys[7], (L, D, FFN)), "b1": jnp.zeros((L, 1, FFN), jnp.float32),
        "w2": nrm(keys[8], (L, FFN, D)), "b2": jnp.zeros((L, 1, D), jnp.float32),
        "ln2_g": jnp.ones((L, 1, D), jnp.float32),
        "ln2_b": jnp.zeros((L, 1, D), jnp.float32),
        # classifier: Linear(D, 30) -> ReLU -> Dropout -> Linear(30, 6)
        "cls_w1": nrm(keys[9], (D, H_CLS)),
        "cls_b1": jnp.zeros((1, H_CLS), jnp.float32),
        "cls_w2": nrm(keys[10], (H_CLS, NUM_LABELS)),
        "cls_b2": jnp.zeros((1, NUM_LABELS), jnp.float32),
    }


def _prep_kernel_weights(p):
    """Fuse QKV (scale folded into q), cast matmul weights to bf16, lane-pad classifier."""
    bf = jnp.bfloat16
    scale = 1.0 / math.sqrt(DH)
    wqkv = jnp.concatenate([p["wq"] * scale, p["wk"], p["wv"]], axis=-1)   # [L, D, 3D]
    bqkv = jnp.concatenate([p["bq"] * scale, p["bk"], p["bv"]], axis=-1)   # [L, 1, 3D]
    cw1 = jnp.zeros((D, CLS_PAD), jnp.float32).at[:, :H_CLS].set(p["cls_w1"])
    cb1 = jnp.zeros((1, CLS_PAD), jnp.float32).at[:, :H_CLS].set(p["cls_b1"])
    cw2 = jnp.zeros((CLS_PAD, CLS_PAD), jnp.float32).at[:H_CLS, :NUM_LABELS].set(p["cls_w2"])
    cb2 = jnp.zeros((1, CLS_PAD), jnp.float32).at[:, :NUM_LABELS].set(p["cls_b2"])
    return (wqkv.astype(bf), bqkv,
            p["wo"].astype(bf), p["bo"],
            p["ln1_g"], p["ln1_b"],
            p["w1"].astype(bf), p["b1"],
            p["w2"].astype(bf), p["b2"],
            p["ln2_g"], p["ln2_b"],
            cw1.astype(bf), cb1, cw2.astype(bf), cb2)


# --------------------------------- forward -------------------------------------
def multilabel_forward(tokens, masks, params):
    # Embedding gather + sum + LayerNorm stays in plain JAX (data-dependent
    # gather is glue); everything downstream is one fused Pallas call.
    x = (params["word_emb"][tokens]
         + params["pos_emb"][None, :, :]
         + params["type_emb"][0][None, None, :])
    x = _layernorm(x, params["emb_ln_g"], params["emb_ln_b"])
    x_flat = x.reshape(BS, D).astype(jnp.float32)

    # Additive attention bias over the merged (B*S) key axis: -1e9 for padded
    # keys and for cross-batch (query, key) pairs.
    batch_ids = jnp.arange(BS, dtype=jnp.int32) // S
    same_batch = batch_ids[:, None] == batch_ids[None, :]
    key_valid = masks.astype(jnp.float32).reshape(BS) > 0.5
    attn_bias = jnp.where(same_batch & key_valid[None, :], 0.0, NEG_INF
                          ).astype(jnp.float32)[None]                       # [1, BS, BS]

    # One-hot per-head lane mask: head h owns lanes [h*DH, (h+1)*DH).
    head_ids = jnp.arange(D, dtype=jnp.int32) // DH
    head_mask = (head_ids[None, :] == jnp.arange(NH, dtype=jnp.int32)[:, None]
                 ).astype(jnp.float32)[:, None, :]                          # [NH, 1, D]

    args = (x_flat, attn_bias, head_mask) + _prep_kernel_weights(params)

    def const2(l): return (0, 0)
    def const3(l): return (0, 0, 0)
    def per_layer(l): return (l, 0, 0)

    grid_spec = pltpu.PrefetchScalarGridSpec(
        num_scalar_prefetch=0,
        grid=(NUM_LAYERS,),
        in_specs=[
            pl.BlockSpec((BS, D), const2),                 # x (consumed at l==0)
            pl.BlockSpec((1, BS, BS), const3),             # attention bias
            pl.BlockSpec((NH, 1, D), const3),              # per-head lane mask
            pl.BlockSpec((1, D, 3 * D), per_layer),        # wqkv  (streamed per layer)
            pl.BlockSpec((1, 1, 3 * D), per_layer),        # bqkv
            pl.BlockSpec((1, D, D), per_layer),            # wo
            pl.BlockSpec((1, 1, D), per_layer),            # bo
            pl.BlockSpec((1, 1, D), per_layer),            # ln1 gamma
            pl.BlockSpec((1, 1, D), per_layer),            # ln1 beta
            pl.BlockSpec((1, D, FFN), per_layer),          # w1
            pl.BlockSpec((1, 1, FFN), per_layer),          # b1
            pl.BlockSpec((1, FFN, D), per_layer),          # w2
            pl.BlockSpec((1, 1, D), per_layer),            # b2
            pl.BlockSpec((1, 1, D), per_layer),            # ln2 gamma
            pl.BlockSpec((1, 1, D), per_layer),            # ln2 beta
            pl.BlockSpec((D, CLS_PAD), const2),            # classifier w1 (lane-padded)
            pl.BlockSpec((1, CLS_PAD), const2),            # classifier b1
            pl.BlockSpec((CLS_PAD, CLS_PAD), const2),      # classifier w2 (lane-padded)
            pl.BlockSpec((1, CLS_PAD), const2),            # classifier b2
        ],
        out_specs=pl.BlockSpec((B, CLS_PAD), const2),
        scratch_shapes=[pltpu.VMEM((BS, D), jnp.float32)],  # carried hidden state
    )

    logits_pad = pl.pallas_call(
        encoder_layer_kernel,
        out_shape=jax.ShapeDtypeStruct((B, CLS_PAD), jnp.float32),
        grid_spec=grid_spec,
        compiler_params=pltpu.CompilerParams(
            # Layer axis is a sequential carry -> "arbitrary". On v7x with a
            # realistic batch, add a leading "parallel" batch grid axis to
            # engage the second TensorCore.
            dimension_semantics=("arbitrary",),
            vmem_limit_bytes=32 * 1024 * 1024),
    )(*args)
    return logits_pad[:, :NUM_LABELS]


# ----------------------------------- main ---------------------------------------
if __name__ == "__main__":
    key = jax.random.PRNGKey(0)
    k_param, k_tok, k_len = jax.random.split(key, 3)

    params = init_params(k_param)
    tokens = jax.random.randint(k_tok, (B, S), 0, VOCAB, dtype=jnp.int32)
    # Simple attention mask: last two positions of batch element 1 are padding.
    masks = jnp.ones((B, S), jnp.float32).at[1, S - 2:].set(0.0)

    logits = multilabel_forward(tokens, masks, params)
    logits = jax.block_until_ready(logits)
    assert logits.shape == (B, NUM_LABELS) and logits.dtype == jnp.float32
    assert bool(jnp.all(jnp.isfinite(logits)))
    print("KERNEL_OK")
</pallas_src>

<mosaic_0001>
module attributes {stable_mosaic.version = 11 : i64} {
  func.func @encoder_layer_kernel(%arg0: i32, %arg1: memref<16x128xf32, #tpu.memory_space<vmem>>, %arg2: memref<1x16x16xf32, #tpu.memory_space<vmem>>, %arg3: memref<4x1x128xf32, #tpu.memory_space<vmem>>, %arg4: memref<1x128x384xbf16, #tpu.memory_space<vmem>>, %arg5: memref<1x1x384xf32, #tpu.memory_space<vmem>>, %arg6: memref<1x128x128xbf16, #tpu.memory_space<vmem>>, %arg7: memref<1x1x128xf32, #tpu.memory_space<vmem>>, %arg8: memref<1x1x128xf32, #tpu.memory_space<vmem>>, %arg9: memref<1x1x128xf32, #tpu.memory_space<vmem>>, %arg10: memref<1x128x512xbf16, #tpu.memory_space<vmem>>, %arg11: memref<1x1x512xf32, #tpu.memory_space<vmem>>, %arg12: memref<1x512x128xbf16, #tpu.memory_space<vmem>>, %arg13: memref<1x1x128xf32, #tpu.memory_space<vmem>>, %arg14: memref<1x1x128xf32, #tpu.memory_space<vmem>>, %arg15: memref<1x1x128xf32, #tpu.memory_space<vmem>>, %arg16: memref<128x128xbf16, #tpu.memory_space<vmem>>, %arg17: memref<1x128xf32, #tpu.memory_space<vmem>>, %arg18: memref<128x128xbf16, #tpu.memory_space<vmem>>, %arg19: memref<1x128xf32, #tpu.memory_space<vmem>>, %arg20: memref<2x128xf32, #tpu.memory_space<vmem>>, %arg21: memref<16x128xf32, #tpu.memory_space<vmem>>) attributes {dimension_semantics = [#tpu.dimension_semantics<arbitrary>], iteration_bounds = array<i64: 2>, scalar_prefetch = 0 : i64, scratch_operands = 1 : i64, tpu.core_type = #tpu.core_type<tc>, window_params = [{pipeline_mode = #tpu.pipeline_mode<synchronous>, transform_indices = @transform_0, window_bounds = array<i64: 16, 128>}, {pipeline_mode = #tpu.pipeline_mode<synchronous>, transform_indices = @transform_1, window_bounds = array<i64: 1, 16, 16>}, {pipeline_mode = #tpu.pipeline_mode<synchronous>, transform_indices = @transform_2, window_bounds = array<i64: 4, 1, 128>}, {transform_indices = @transform_3, window_bounds = array<i64: 1, 128, 384>}, {transform_indices = @transform_4, window_bounds = array<i64: 1, 1, 384>}, {transform_indices = @transform_5, window_bounds = array<i64: 1, 128, 128>}, {transform_indices = @transform_6, window_bounds = array<i64: 1, 1, 128>}, {transform_indices = @transform_7, window_bounds = array<i64: 1, 1, 128>}, {transform_indices = @transform_8, window_bounds = array<i64: 1, 1, 128>}, {transform_indices = @transform_9, window_bounds = array<i64: 1, 128, 512>}, {transform_indices = @transform_10, window_bounds = array<i64: 1, 1, 512>}, {transform_indices = @transform_11, window_bounds = array<i64: 1, 512, 128>}, {transform_indices = @transform_12, window_bounds = array<i64: 1, 1, 128>}, {transform_indices = @transform_13, window_bounds = array<i64: 1, 1, 128>}, {transform_indices = @transform_14, window_bounds = array<i64: 1, 1, 128>}, {pipeline_mode = #tpu.pipeline_mode<synchronous>, transform_indices = @transform_15, window_bounds = array<i64: 128, 128>}, {pipeline_mode = #tpu.pipeline_mode<synchronous>, transform_indices = @transform_16, window_bounds = array<i64: 1, 128>}, {pipeline_mode = #tpu.pipeline_mode<synchronous>, transform_indices = @transform_17, window_bounds = array<i64: 128, 128>}, {pipeline_mode = #tpu.pipeline_mode<synchronous>, transform_indices = @transform_18, window_bounds = array<i64: 1, 128>}, {pipeline_mode = #tpu.pipeline_mode<synchronous>, transform_indices = @transform_19, window_bounds = array<i64: 2, 128>}]} {
    %c0_i32 = arith.constant 0 : i32
    %0 = arith.cmpi eq, %arg0, %c0_i32 : i32
    %1 = arith.extui %0 : i1 to i32
    %c0_i32_0 = arith.constant 0 : i32
    %2 = arith.cmpi ne, %1, %c0_i32_0 : i32
    scf.if %2 {
      %c0_68 = arith.constant 0 : index
      %c0_69 = arith.constant 0 : index
      %151 = vector.load %arg1[%c0_68, %c0_69] : memref<16x128xf32, #tpu.memory_space<vmem>>, vector<16x128xf32>
      %c0_70 = arith.constant 0 : index
      %c0_71 = arith.constant 0 : index
      %152 = vector.load %arg21[%c0_70, %c0_71] : memref<16x128xf32, #tpu.memory_space<vmem>>, vector<16x128xf32>
      tpu.vector_store %arg21[%c0_70, %c0_71], %151 {strides = array<i32>} : memref<16x128xf32, #tpu.memory_space<vmem>>, vector<16x128xf32>,
    } else {
    }
    %c0 = arith.constant 0 : index
    %c0_1 = arith.constant 0 : index
    %3 = vector.load %arg21[%c0, %c0_1] : memref<16x128xf32, #tpu.memory_space<vmem>>, vector<16x128xf32>
    %4 = arith.truncf %3 : vector<16x128xf32> to vector<16x128xbf16>
    %c0_2 = arith.constant 0 : index
    %c0_3 = arith.constant 0 : index
    %c0_4 = arith.constant 0 : index
    %5 = vector.load %arg4[%c0_2, %c0_3, %c0_4] : memref<1x128x384xbf16, #tpu.memory_space<vmem>>, vector<1x128x384xbf16>
    %6 = vector.shape_cast %5 : vector<1x128x384xbf16> to vector<128x384xbf16>
    %cst = arith.constant dense<0.000000e+00> : vector<16x384xf32>
    %7 = tpu.matmul %4, %6, %cst {dimension_numbers = #tpu.dot_dimension_numbers<[1], [0], [0], [1], [0, 0, 1, 1], [], []>} : vector<16x128xbf16>, vector<128x384xbf16>, vector<16x384xf32> -> vector<16x384xf32>
    %c0_5 = arith.constant 0 : index
    %c0_6 = arith.constant 0 : index
    %c0_7 = arith.constant 0 : index
    %8 = vector.load %arg5[%c0_5, %c0_6, %c0_7] : memref<1x1x384xf32, #tpu.memory_space<vmem>>, vector<1x1x384xf32>
    %9 = vector.shape_cast %8 : vector<1x1x384xf32> to vector<1x384xf32>
    %10 = vector.broadcast %9 : vector<1x384xf32> to vector<16x384xf32>
    %11 = arith.addf %7, %10 : vector<16x384xf32>
    %12 = vector.extract_strided_slice %11 {offsets = [0, 0], sizes = [16, 128], strides = [1, 1]} : vector<16x384xf32> to vector<16x128xf32>
    %13 = vector.extract_strided_slice %11 {offsets = [0, 128], sizes = [16, 128], strides = [1, 1]} : vector<16x384xf32> to vector<16x128xf32>
    %14 = vector.extract_strided_slice %11 {offsets = [0, 256], sizes = [16, 128], strides = [1, 1]} : vector<16x384xf32> to vector<16x128xf32>
    %c0_8 = arith.constant 0 : index
    %c0_9 = arith.constant 0 : index
    %c0_10 = arith.constant 0 : index
    %15 = vector.load %arg3[%c0_8, %c0_9, %c0_10] : memref<4x1x128xf32, #tpu.memory_space<vmem>>, vector<4x1x128xf32>
    %16 = vector.shape_cast %12 : vector<16x128xf32> to vector<1x16x128xf32>
    %17 = vector.broadcast %16 : vector<1x16x128xf32> to vector<4x16x128xf32>
    %18 = vector.broadcast %15 : vector<4x1x128xf32> to vector<4x16x128xf32>
    %19 = arith.mulf %17, %18 : vector<4x16x128xf32>
    %20 = arith.truncf %19 : vector<4x16x128xf32> to vector<4x16x128xbf16>
    %21 = arith.truncf %13 : vector<16x128xf32> to vector<16x128xbf16>
    %22 = vector.shape_cast %21 : vector<16x128xbf16> to vector<1x16x128xbf16>
    %23 = vector.broadcast %22 : vector<1x16x128xbf16> to vector<4x16x128xbf16>
    %24 = vector.shape_cast %14 : vector<16x128xf32> to vector<1x16x128xf32>
    %25 = vector.broadcast %24 : vector<1x16x128xf32> to vector<4x16x128xf32>
    %26 = vector.broadcast %15 : vector<4x1x128xf32> to vector<4x16x128xf32>
    %27 = arith.mulf %25, %26 : vector<4x16x128xf32>
    %28 = arith.truncf %27 : vector<4x16x128xf32> to vector<4x16x128xbf16>
    "tpu.trace_start"() <{level = 10 : i32, message = "hqd,hkd->hqk"}> : () -> ()
    %cst_11 = arith.constant dense<0.000000e+00> : vector<4x16x16xf32>
    %29 = tpu.matmul %20, %23, %cst_11 {dimension_numbers = #tpu.dot_dimension_numbers<[2], [2], [1], [1], [0, 0, 0, 1, 1, 1], [0], [0]>} : vector<4x16x128xbf16>, vector<4x16x128xbf16>, vector<4x16x16xf32> -> vector<4x16x16xf32>
    "tpu.trace_stop"() : () -> ()
    %c0_12 = arith.constant 0 : index
    %c0_13 = arith.constant 0 : index
    %c0_14 = arith.constant 0 : index
    %30 = vector.load %arg2[%c0_12, %c0_13, %c0_14] : memref<1x16x16xf32, #tpu.memory_space<vmem>>, vector<1x16x16xf32>
    %31 = vector.broadcast %30 : vector<1x16x16xf32> to vector<4x16x16xf32>
    %32 = arith.addf %29, %31 : vector<4x16x16xf32>
    %cst_15 = arith.constant dense<0xFF800000> : vector<4x16xf32>
    %33 = vector.multi_reduction <maximumf>, %32, %cst_15 [2] : vector<4x16x16xf32> to vector<4x16xf32>
    %34 = vector.shape_cast %33 : vector<4x16xf32> to vector<4x16x1xf32>
    %35 = vector.broadcast %34 : vector<4x16x1xf32> to vector<4x16x16xf32>
    %36 = arith.subf %32, %35 : vector<4x16x16xf32>
    %37 = math.exp %36 : vector<4x16x16xf32>
    %cst_16 = arith.constant dense<0.000000e+00> : vector<4x16xf32>
    %38 = vector.multi_reduction <add>, %37, %cst_16 [2] : vector<4x16x16xf32> to vector<4x16xf32>
    %39 = vector.shape_cast %38 : vector<4x16xf32> to vector<4x16x1xf32>
    %40 = tpu.reciprocal %39 {approx = true} : vector<4x16x1xf32> -> vector<4x16x1xf32>
    %41 = vector.broadcast %40 : vector<4x16x1xf32> to vector<4x16x16xf32>
    %42 = arith.mulf %37, %41 : vector<4x16x16xf32>
    %43 = arith.truncf %42 : vector<4x16x16xf32> to vector<4x16x16xbf16>
    "tpu.trace_start"() <{level = 10 : i32, message = "hqk,hkd->hqd"}> : () -> ()
    %cst_17 = arith.constant dense<0.000000e+00> : vector<4x16x128xf32>
    %44 = tpu.matmul %43, %28, %cst_17 {dimension_numbers = #tpu.dot_dimension_numbers<[2], [1], [1], [2], [0, 0, 0, 1, 1, 2], [0], [0]>} : vector<4x16x16xbf16>, vector<4x16x128xbf16>, vector<4x16x128xf32> -> vector<4x16x128xf32>
    "tpu.trace_stop"() : () -> ()
    %45 = vector.extract_strided_slice %44 {offsets = [0, 0, 0], sizes = [1, 16, 128], strides = [1, 1, 1]} : vector<4x16x128xf32> to vector<1x16x128xf32>
    %46 = vector.shape_cast %45 : vector<1x16x128xf32> to vector<16x128xf32>
    %47 = vector.extract_strided_slice %44 {offsets = [1, 0, 0], sizes = [1, 16, 128], strides = [1, 1, 1]} : vector<4x16x128xf32> to vector<1x16x128xf32>
    %48 = vector.shape_cast %47 : vector<1x16x128xf32> to vector<16x128xf32>
    %49 = arith.addf %46, %48 : vector<16x128xf32>
    %50 = vector.extract_strided_slice %44 {offsets = [2, 0, 0], sizes = [1, 16, 128], strides = [1, 1, 1]} : vector<4x16x128xf32> to vector<1x16x128xf32>
    %51 = vector.shape_cast %50 : vector<1x16x128xf32> to vector<16x128xf32>
    %52 = arith.addf %49, %51 : vector<16x128xf32>
    %53 = vector.extract_strided_slice %44 {offsets = [3, 0, 0], sizes = [1, 16, 128], strides = [1, 1, 1]} : vector<4x16x128xf32> to vector<1x16x128xf32>
    %54 = vector.shape_cast %53 : vector<1x16x128xf32> to vector<16x128xf32>
    %55 = arith.addf %52, %54 : vector<16x128xf32>
    %56 = arith.truncf %55 : vector<16x128xf32> to vector<16x128xbf16>
    %c0_18 = arith.constant 0 : index
    %c0_19 = arith.constant 0 : index
    %c0_20 = arith.constant 0 : index
    %57 = vector.load %arg6[%c0_18, %c0_19, %c0_20] : memref<1x128x128xbf16, #tpu.memory_space<vmem>>, vector<1x128x128xbf16>
    %58 = vector.shape_cast %57 : vector<1x128x128xbf16> to vector<128x128xbf16>
    %cst_21 = arith.constant dense<0.000000e+00> : vector<16x128xf32>
    %59 = tpu.matmul %56, %58, %cst_21 {dimension_numbers = #tpu.dot_dimension_numbers<[1], [0], [0], [1], [0, 0, 1, 1], [], []>} : vector<16x128xbf16>, vector<128x128xbf16>, vector<16x128xf32> -> vector<16x128xf32>
    %c0_22 = arith.constant 0 : index
    %c0_23 = arith.constant 0 : index
    %c0_24 = arith.constant 0 : index
    %60 = vector.load %arg7[%c0_22, %c0_23, %c0_24] : memref<1x1x128xf32, #tpu.memory_space<vmem>>, vector<1x1x128xf32>
    %61 = vector.shape_cast %60 : vector<1x1x128xf32> to vector<1x128xf32>
    %62 = vector.broadcast %61 : vector<1x128xf32> to vector<16x128xf32>
    %63 = arith.addf %59, %62 : vector<16x128xf32>
    %64 = arith.addf %3, %63 : vector<16x128xf32>
    %c0_25 = arith.constant 0 : index
    %c0_26 = arith.constant 0 : index
    %c0_27 = arith.constant 0 : index
    %65 = vector.load %arg8[%c0_25, %c0_26, %c0_27] : memref<1x1x128xf32, #tpu.memory_space<vmem>>, vector<1x1x128xf32>
    %66 = vector.shape_cast %65 : vector<1x1x128xf32> to vector<1x128xf32>
    %c0_28 = arith.constant 0 : index
    %c0_29 = arith.constant 0 : index
    %c0_30 = arith.constant 0 : index
    %67 = vector.load %arg9[%c0_28, %c0_29, %c0_30] : memref<1x1x128xf32, #tpu.memory_space<vmem>>, vector<1x1x128xf32>
    %68 = vector.shape_cast %67 : vector<1x1x128xf32> to vector<1x128xf32>
    %cst_31 = arith.constant dense<0.000000e+00> : vector<16xf32>
    %69 = vector.multi_reduction <add>, %64, %cst_31 [1] : vector<16x128xf32> to vector<16xf32>
    %70 = vector.shape_cast %69 : vector<16xf32> to vector<16x1xf32>
    %cst_32 = arith.constant 1.280000e+02 : f32
    %71 = vector.broadcast %cst_32 : f32 to vector<16x1xf32>
    %72 = arith.divf %70, %71 : vector<16x1xf32>
    %73 = vector.broadcast %72 : vector<16x1xf32> to vector<16x128xf32>
    %74 = arith.subf %64, %73 : vector<16x128xf32>
    %75 = arith.mulf %74, %74 : vector<16x128xf32>
    %cst_33 = arith.constant dense<0.000000e+00> : vector<16xf32>
    %76 = vector.multi_reduction <add>, %75, %cst_33 [1] : vector<16x128xf32> to vector<16xf32>
    %77 = vector.shape_cast %76 : vector<16xf32> to vector<16x1xf32>
    %cst_34 = arith.constant 1.280000e+02 : f32
    %78 = vector.broadcast %cst_34 : f32 to vector<16x1xf32>
    %79 = arith.divf %77, %78 : vector<16x1xf32>
    %80 = vector.broadcast %72 : vector<16x1xf32> to vector<16x128xf32>
    %81 = arith.subf %64, %80 : vector<16x128xf32>
    %cst_35 = arith.constant 9.99999996E-13 : f32
    %82 = vector.broadcast %cst_35 : f32 to vector<16x1xf32>
    %83 = arith.addf %79, %82 : vector<16x1xf32>
    %84 = math.rsqrt %83 : vector<16x1xf32>
    %85 = vector.broadcast %84 : vector<16x1xf32> to vector<16x128xf32>
    %86 = arith.mulf %81, %85 : vector<16x128xf32>
    %87 = vector.broadcast %66 : vector<1x128xf32> to vector<16x128xf32>
    %88 = arith.mulf %86, %87 : vector<16x128xf32>
    %89 = vector.broadcast %68 : vector<1x128xf32> to vector<16x128xf32>
    %90 = arith.addf %88, %89 : vector<16x128xf32>
    %91 = arith.truncf %90 : vector<16x128xf32> to vector<16x128xbf16>
    %c0_36 = arith.constant 0 : index
    %c0_37 = arith.constant 0 : index
    %c0_38 = arith.constant 0 : index
    %92 = vector.load %arg10[%c0_36, %c0_37, %c0_38] : memref<1x128x512xbf16, #tpu.memory_space<vmem>>, vector<1x128x512xbf16>
    %93 = vector.shape_cast %92 : vector<1x128x512xbf16> to vector<128x512xbf16>
    %cst_39 = arith.constant dense<0.000000e+00> : vector<16x512xf32>
    %94 = tpu.matmul %91, %93, %cst_39 {dimension_numbers = #tpu.dot_dimension_numbers<[1], [0], [0], [1], [0, 0, 1, 1], [], []>} : vector<16x128xbf16>, vector<128x512xbf16>, vector<16x512xf32> -> vector<16x512xf32>
    %c0_40 = arith.constant 0 : index
    %c0_41 = arith.constant 0 : index
    %c0_42 = arith.constant 0 : index
    %95 = vector.load %arg11[%c0_40, %c0_41, %c0_42] : memref<1x1x512xf32, #tpu.memory_space<vmem>>, vector<1x1x512xf32>
    %96 = vector.shape_cast %95 : vector<1x1x512xf32> to vector<1x512xf32>
    %97 = vector.broadcast %96 : vector<1x512xf32> to vector<16x512xf32>
    %98 = arith.addf %94, %97 : vector<16x512xf32>
    %99 = arith.mulf %98, %98 : vector<16x512xf32>
    %100 = arith.mulf %98, %99 : vector<16x512xf32>
    %cst_43 = arith.constant 4.471500e-02 : f32
    %101 = vector.broadcast %cst_43 : f32 to vector<16x512xf32>
    %102 = arith.mulf %101, %100 : vector<16x512xf32>
    %103 = arith.addf %98, %102 : vector<16x512xf32>
    %cst_44 = arith.constant 0.797884583 : f32
    %104 = vector.broadcast %cst_44 : f32 to vector<16x512xf32>
    %105 = arith.mulf %104, %103 : vector<16x512xf32>
    %106 = math.tanh %105 : vector<16x512xf32>
    %cst_45 = arith.constant 1.000000e+00 : f32
    %107 = vector.broadcast %cst_45 : f32 to vector<16x512xf32>
    %108 = arith.addf %107, %106 : vector<16x512xf32>
    %cst_46 = arith.constant 5.000000e-01 : f32
    %109 = vector.broadcast %cst_46 : f32 to vector<16x512xf32>
    %110 = arith.mulf %109, %108 : vector<16x512xf32>
    %111 = arith.mulf %98, %110 : vector<16x512xf32>
    %112 = arith.truncf %111 : vector<16x512xf32> to vector<16x512xbf16>
    %c0_47 = arith.constant 0 : index
    %c0_48 = arith.constant 0 : index
    %c0_49 = arith.constant 0 : index
    %113 = vector.load %arg12[%c0_47, %c0_48, %c0_49] : memref<1x512x128xbf16, #tpu.memory_space<vmem>>, vector<1x512x128xbf16>
    %114 = vector.shape_cast %113 : vector<1x512x128xbf16> to vector<512x128xbf16>
    %cst_50 = arith.constant dense<0.000000e+00> : vector<16x128xf32>
    %115 = tpu.matmul %112, %114, %cst_50 {dimension_numbers = #tpu.dot_dimension_numbers<[1], [0], [0], [1], [0, 0, 1, 1], [], []>} : vector<16x512xbf16>, vector<512x128xbf16>, vector<16x128xf32> -> vector<16x128xf32>
    %c0_51 = arith.constant 0 : index
    %c0_52 = arith.constant 0 : index
    %c0_53 = arith.constant 0 : index
    %116 = vector.load %arg13[%c0_51, %c0_52, %c0_53] : memref<1x1x128xf32, #tpu.memory_space<vmem>>, vector<1x1x128xf32>
    %117 = vector.shape_cast %116 : vector<1x1x128xf32> to vector<1x128xf32>
    %118 = vector.broadcast %117 : vector<1x128xf32> to vector<16x128xf32>
    %119 = arith.addf %115, %118 : vector<16x128xf32>
    %120 = arith.addf %90, %119 : vector<16x128xf32>
    %c0_54 = arith.constant 0 : index
    %c0_55 = arith.constant 0 : index
    %c0_56 = arith.constant 0 : index
    %121 = vector.load %arg14[%c0_54, %c0_55, %c0_56] : memref<1x1x128xf32, #tpu.memory_space<vmem>>, vector<1x1x128xf32>
    %122 = vector.shape_cast %121 : vector<1x1x128xf32> to vector<1x128xf32>
    %c0_57 = arith.constant 0 : index
    %c0_58 = arith.constant 0 : index
    %c0_59 = arith.constant 0 : index
    %123 = vector.load %arg15[%c0_57, %c0_58, %c0_59] : memref<1x1x128xf32, #tpu.memory_space<vmem>>, vector<1x1x128xf32>
    %124 = vector.shape_cast %123 : vector<1x1x128xf32> to vector<1x128xf32>
    %cst_60 = arith.constant dense<0.000000e+00> : vector<16xf32>
    %125 = vector.multi_reduction <add>, %120, %cst_60 [1] : vector<16x128xf32> to vector<16xf32>
    %126 = vector.shape_cast %125 : vector<16xf32> to vector<16x1xf32>
    %cst_61 = arith.constant 1.280000e+02 : f32
    %127 = vector.broadcast %cst_61 : f32 to vector<16x1xf32>
    %128 = arith.divf %126, %127 : vector<16x1xf32>
    %129 = vector.broadcast %128 : vector<16x1xf32> to vector<16x128xf32>
    %130 = arith.subf %120, %129 : vector<16x128xf32>
    %131 = arith.mulf %130, %130 : vector<16x128xf32>
    %cst_62 = arith.constant dense<0.000000e+00> : vector<16xf32>
    %132 = vector.multi_reduction <add>, %131, %cst_62 [1] : vector<16x128xf32> to vector<16xf32>
    %133 = vector.shape_cast %132 : vector<16xf32> to vector<16x1xf32>
    %cst_63 = arith.constant 1.280000e+02 : f32
    %134 = vector.broadcast %cst_63 : f32 to vector<16x1xf32>
    %135 = arith.divf %133, %134 : vector<16x1xf32>
    %136 = vector.broadcast %128 : vector<16x1xf32> to vector<16x128xf32>
    %137 = arith.subf %120, %136 : vector<16x128xf32>
    %cst_64 = arith.constant 9.99999996E-13 : f32
    %138 = vector.broadcast %cst_64 : f32 to vector<16x1xf32>
    %139 = arith.addf %135, %138 : vector<16x1xf32>
    %140 = math.rsqrt %139 : vector<16x1xf32>
    %141 = vector.broadcast %140 : vector<16x1xf32> to vector<16x128xf32>
    %142 = arith.mulf %137, %141 : vector<16x128xf32>
    %143 = vector.broadcast %122 : vector<1x128xf32> to vector<16x128xf32>
    %144 = arith.mulf %142, %143 : vector<16x128xf32>
    %145 = vector.broadcast %124 : vector<1x128xf32> to vector<16x128xf32>
    %146 = arith.addf %144, %145 : vector<16x128xf32>
    %c0_65 = arith.constant 0 : index
    %c0_66 = arith.constant 0 : index
    %147 = vector.load %arg21[%c0_65, %c0_66] : memref<16x128xf32, #tpu.memory_space<vmem>>, vector<16x128xf32>
    tpu.vector_store %arg21[%c0_65, %c0_66], %146 {strides = array<i32>} : memref<16x128xf32, #tpu.memory_space<vmem>>, vector<16x128xf32>,
    %c1_i32 = arith.constant 1 : i32
    %148 = arith.cmpi eq, %arg0, %c1_i32 : i32
    %149 = arith.extui %148 : i1 to i32
    %c0_i32_67 = arith.constant 0 : i32
    %150 = arith.cmpi ne, %149, %c0_i32_67 : i32
    scf.if %150 {
      %151 = vector.shape_cast %146 : vector<16x128xf32> to vector<2x8x128xf32>
      %152 = vector.extract_strided_slice %151 {offsets = [0, 0, 0], sizes = [2, 1, 128], strides = [1, 1, 1]} : vector<2x8x128xf32> to vector<2x1x128xf32>
      %153 = vector.shape_cast %152 : vector<2x1x128xf32> to vector<2x128xf32>
      %154 = arith.truncf %153 : vector<2x128xf32> to vector<2x128xbf16>
      %c0_68 = arith.constant 0 : index
      %c0_69 = arith.constant 0 : index
      %155 = vector.load %arg16[%c0_68, %c0_69] : memref<128x128xbf16, #tpu.memory_space<vmem>>, vector<128x128xbf16>
      %cst_70 = arith.constant dense<0.000000e+00> : vector<2x128xf32>
      %156 = tpu.matmul %154, %155, %cst_70 {dimension_numbers = #tpu.dot_dimension_numbers<[1], [0], [0], [1], [0, 0, 1, 1], [], []>} : vector<2x128xbf16>, vector<128x128xbf16>, vector<2x128xf32> -> vector<2x128xf32>
      %c0_71 = arith.constant 0 : index
      %c0_72 = arith.constant 0 : index
      %157 = vector.load %arg17[%c0_71, %c0_72] : memref<1x128xf32, #tpu.memory_space<vmem>>, vector<1x128xf32>
      %158 = vector.broadcast %157 : vector<1x128xf32> to vector<2x128xf32>
      %159 = arith.addf %156, %158 : vector<2x128xf32>
      %cst_73 = arith.constant 0.000000e+00 : f32
      %160 = vector.broadcast %cst_73 : f32 to vector<2x128xf32>
      %161 = arith.maximumf %159, %160 : vector<2x128xf32>
      %162 = arith.truncf %161 : vector<2x128xf32> to vector<2x128xbf16>
      %c0_74 = arith.constant 0 : index
      %c0_75 = arith.constant 0 : index
      %163 = vector.load %arg18[%c0_74, %c0_75] : memref<128x128xbf16, #tpu.memory_space<vmem>>, vector<128x128xbf16>
      %cst_76 = arith.constant dense<0.000000e+00> : vector<2x128xf32>
      %164 = tpu.matmul %162, %163, %cst_76 {dimension_numbers = #tpu.dot_dimension_numbers<[1], [0], [0], [1], [0, 0, 1, 1], [], []>} : vector<2x128xbf16>, vector<128x128xbf16>, vector<2x128xf32> -> vector<2x128xf32>
      %c0_77 = arith.constant 0 : index
      %c0_78 = arith.constant 0 : index
      %165 = vector.load %arg19[%c0_77, %c0_78] : memref<1x128xf32, #tpu.memory_space<vmem>>, vector<1x128xf32>
      %166 = vector.broadcast %165 : vector<1x128xf32> to vector<2x128xf32>
      %167 = arith.addf %164, %166 : vector<2x128xf32>
      %c0_79 = arith.constant 0 : index
      %c0_80 = arith.constant 0 : index
      %168 = vector.load %arg20[%c0_79, %c0_80] : memref<2x128xf32, #tpu.memory_space<vmem>>, vector<2x128xf32>
      tpu.vector_store %arg20[%c0_79, %c0_80], %167 {strides = array<i32>} : memref<2x128xf32, #tpu.memory_space<vmem>>, vector<2x128xf32>,
    } else {
    }
    return
  }
  func.func @transform_0(%arg0: i32) -> (i32, i32) {
    %c0_i32 = arith.constant 0 : i32
    %c0_i32_0 = arith.constant 0 : i32
    %c0_i32_1 = arith.constant 0 : i32
    return %c0_i32, %c0_i32_0 : i32, i32
  }
  func.func @transform_1(%arg0: i32) -> (i32, i32, i32) {
    %c0_i32 = arith.constant 0 : i32
    %c0_i32_0 = arith.constant 0 : i32
    %c0_i32_1 = arith.constant 0 : i32
    %c0_i32_2 = arith.constant 0 : i32
    return %c0_i32, %c0_i32_0, %c0_i32_1 : i32, i32, i32
  }
  func.func @transform_2(%arg0: i32) -> (i32, i32, i32) {
    %c0_i32 = arith.constant 0 : i32
    %c0_i32_0 = arith.constant 0 : i32
    %c0_i32_1 = arith.constant 0 : i32
    %c0_i32_2 = arith.constant 0 : i32
    return %c0_i32, %c0_i32_0, %c0_i32_1 : i32, i32, i32
  }
  func.func @transform_3(%arg0: i32) -> (i32, i32, i32) {
    %c0_i32 = arith.constant 0 : i32
    %c0_i32_0 = arith.constant 0 : i32
    %c0_i32_1 = arith.constant 0 : i32
    return %arg0, %c0_i32, %c0_i32_0 : i32, i32, i32
  }
  func.func @transform_4(%arg0: i32) -> (i32, i32, i32) {
    %c0_i32 = arith.constant 0 : i32
    %c0_i32_0 = arith.constant 0 : i32
    %c0_i32_1 = arith.constant 0 : i32
    return %arg0, %c0_i32, %c0_i32_0 : i32, i32, i32
  }
  func.func @transform_5(%arg0: i32) -> (i32, i32, i32) {
    %c0_i32 = arith.constant 0 : i32
    %c0_i32_0 = arith.constant 0 : i32
    %c0_i32_1 = arith.constant 0 : i32
    return %arg0, %c0_i32, %c0_i32_0 : i32, i32, i32
  }
  func.func @transform_6(%arg0: i32) -> (i32, i32, i32) {
    %c0_i32 = arith.constant 0 : i32
    %c0_i32_0 = arith.constant 0 : i32
    %c0_i32_1 = arith.constant 0 : i32
    return %arg0, %c0_i32, %c0_i32_0 : i32, i32, i32
  }
  func.func @transform_7(%arg0: i32) -> (i32, i32, i32) {
    %c0_i32 = arith.constant 0 : i32
    %c0_i32_0 = arith.constant 0 : i32
    %c0_i32_1 = arith.constant 0 : i32
    return %arg0, %c0_i32, %c0_i32_0 : i32, i32, i32
  }
  func.func @transform_8(%arg0: i32) -> (i32, i32, i32) {
    %c0_i32 = arith.constant 0 : i32
    %c0_i32_0 = arith.constant 0 : i32
    %c0_i32_1 = arith.constant 0 : i32
    return %arg0, %c0_i32, %c0_i32_0 : i32, i32, i32
  }
  func.func @transform_9(%arg0: i32) -> (i32, i32, i32) {
    %c0_i32 = arith.constant 0 : i32
    %c0_i32_0 = arith.constant 0 : i32
    %c0_i32_1 = arith.constant 0 : i32
    return %arg0, %c0_i32, %c0_i32_0 : i32, i32, i32
  }
  func.func @transform_10(%arg0: i32) -> (i32, i32, i32) {
    %c0_i32 = arith.constant 0 : i32
    %c0_i32_0 = arith.constant 0 : i32
    %c0_i32_1 = arith.constant 0 : i32
    return %arg0, %c0_i32, %c0_i32_0 : i32, i32, i32
  }
  func.func @transform_11(%arg0: i32) -> (i32, i32, i32) {
    %c0_i32 = arith.constant 0 : i32
    %c0_i32_0 = arith.constant 0 : i32
    %c0_i32_1 = arith.constant 0 : i32
    return %arg0, %c0_i32, %c0_i32_0 : i32, i32, i32
  }
  func.func @transform_12(%arg0: i32) -> (i32, i32, i32) {
    %c0_i32 = arith.constant 0 : i32
    %c0_i32_0 = arith.constant 0 : i32
    %c0_i32_1 = arith.constant 0 : i32
    return %arg0, %c0_i32, %c0_i32_0 : i32, i32, i32
  }
  func.func @transform_13(%arg0: i32) -> (i32, i32, i32) {
    %c0_i32 = arith.constant 0 : i32
    %c0_i32_0 = arith.constant 0 : i32
    %c0_i32_1 = arith.constant 0 : i32
    return %arg0, %c0_i32, %c0_i32_0 : i32, i32, i32
  }
  func.func @transform_14(%arg0: i32) -> (i32, i32, i32) {
    %c0_i32 = arith.constant 0 : i32
    %c0_i32_0 = arith.constant 0 : i32
    %c0_i32_1 = arith.constant 0 : i32
    return %arg0, %c0_i32, %c0_i32_0 : i32, i32, i32
  }
  func.func @transform_15(%arg0: i32) -> (i32, i32) {
    %c0_i32 = arith.constant 0 : i32
    %c0_i32_0 = arith.constant 0 : i32
    %c0_i32_1 = arith.constant 0 : i32
    return %c0_i32, %c0_i32_0 : i32, i32
  }
  func.func @transform_16(%arg0: i32) -> (i32, i32) {
    %c0_i32 = arith.constant 0 : i32
    %c0_i32_0 = arith.constant 0 : i32
    %c0_i32_1 = arith.constant 0 : i32
    return %c0_i32, %c0_i32_0 : i32, i32
  }
  func.func @transform_17(%arg0: i32) -> (i32, i32) {
    %c0_i32 = arith.constant 0 : i32
    %c0_i32_0 = arith.constant 0 : i32
    %c0_i32_1 = arith.constant 0 : i32
    return %c0_i32, %c0_i32_0 : i32, i32
  }
  func.func @transform_18(%arg0: i32) -> (i32, i32) {
    %c0_i32 = arith.constant 0 : i32
    %c0_i32_0 = arith.constant 0 : i32
    %c0_i32_1 = arith.constant 0 : i32
    return %c0_i32, %c0_i32_0 : i32, i32
  }
  func.func @transform_19(%arg0: i32) -> (i32, i32) {
    %c0_i32 = arith.constant 0 : i32
    %c0_i32_0 = arith.constant 0 : i32
    %c0_i32_1 = arith.constant 0 : i32
    return %c0_i32, %c0_i32_0 : i32, i32
  }
}

</mosaic_0001>

<llo_original>
// kernel: tpu_custom_call.1
$region0: #{tpu_custom_call.1}
  #allocation0 [shape = 'u32[]', space=smem, size = 0x4, offset = 0x4, fixed_abs, tag = 'smem constant byte address 0x4 - core index']
  #allocation1 [shape = 'u32[72,128]{1,0:T(1,128)}', space=vmem, size = 0x9000, scoped, tag = 'internal scratch']
  #allocation2 [shape = 'f32[16,128]{1,0:T(8,128)}', space=vmem, size = 0x2000, scoped, tag = 'scratch operand']
  %s0 = inlined_call_operand.hbm [shape: f32[16,128], index: 0, kind: input, shape index: {}]
  %s1 = inlined_call_operand.hbm [shape: f32[1,16,16], index: 1, kind: input, shape index: {}]
  %s2 = inlined_call_operand.hbm [shape: f32[4,1,128], index: 2, kind: input, shape index: {}]
  %s3 = inlined_call_operand.hbm [shape: bf16[2,128,384], index: 3, kind: input, shape index: {}]
  %s4 = inlined_call_operand.hbm [shape: f32[2,1,384], index: 4, kind: input, shape index: {}]
  %s5 = inlined_call_operand.hbm [shape: bf16[2,128,128], index: 5, kind: input, shape index: {}]
  %s6 = inlined_call_operand.hbm [shape: f32[2,1,128], index: 6, kind: input, shape index: {}]
  %s7 = inlined_call_operand.hbm [shape: f32[2,1,128], index: 7, kind: input, shape index: {}]
  %s8 = inlined_call_operand.hbm [shape: f32[2,1,128], index: 8, kind: input, shape index: {}]
  %s9 = inlined_call_operand.hbm [shape: bf16[2,128,512], index: 9, kind: input, shape index: {}]
  %s10 = inlined_call_operand.vmem [shape: f32[2,1,512], index: 10, kind: input, shape index: {}]
  %s11 = inlined_call_operand.hbm [shape: bf16[2,512,128], index: 11, kind: input, shape index: {}]
  %s12 = inlined_call_operand.vmem [shape: f32[2,1,128], index: 12, kind: input, shape index: {}]
  %s13 = inlined_call_operand.vmem [shape: f32[2,1,128], index: 13, kind: input, shape index: {}]
  %s14 = inlined_call_operand.hbm [shape: f32[2,1,128], index: 14, kind: input, shape index: {}]
  %s15 = inlined_call_operand.hbm [shape: bf16[128,128], index: 15, kind: input, shape index: {}]
  %s16 = inlined_call_operand.vmem [shape: f32[1,128], index: 16, kind: input, shape index: {}]
  %s17 = inlined_call_operand.hbm [shape: bf16[128,128], index: 17, kind: input, shape index: {}]
  %s18 = inlined_call_operand.vmem [shape: f32[1,128], index: 18, kind: input, shape index: {}]
  %s19 = inlined_call_operand.hbm [shape: f32[2,128], index: 19, kind: output, shape index: {}]
  %s20 = sld [smem:[#allocation0]]
  $region173: #{tpu_custom_call.1} parent=0
    _
  %s22 = ssub.s32 1, %s20
  %s23 = scalar_select 0, %s22, %s20
  $region1: #{tpu_custom_call.1} parent=0
    #allocation3 [shape = 'u8[8192]{0}', space=vmem, size = 0x2000, scoped, tag = 'input window, operand 0, single buffered']
    #allocation4 [shape = 's32[2]{0}', space=sflag, size = 0x8, scoped, tag = 'scoped memory for tpu_custom_call.1']
    #allocation5 [shape = 's32[2]{0}', space=sflag, size = 0x8, scoped, tag = 'scoped memory for tpu_custom_call.1']
    #allocation6 [shape = 'u8[8192]{0}', space=vmem, size = 0x2000, scoped, tag = 'input window, operand 1, single buffered']
    #allocation7 [shape = 's32[1]{0}', space=sflag, size = 0x4, scoped, tag = 'scoped memory for tpu_custom_call.1']
    #allocation8 [shape = 'u8[2048]{0}', space=vmem, size = 0x800, scoped, tag = 'input window, operand 2, single buffered']
    #allocation9 [shape = 'u8[196608]{0}', space=vmem, size = 0x30000, scoped, tag = 'input window, operand 3']
    #allocation10 [shape = 's32[2]{0}', space=sflag, size = 0x8, scoped, tag = 'scoped memory for tpu_custom_call.1']
    #allocation11 [shape = 'u8[3072]{0}', space=vmem, size = 0xc00, scoped, tag = 'input window, operand 4']
    #allocation12 [shape = 'u8[65536]{0}', space=vmem, size = 0x10000, scoped, tag = 'input window, operand 5']
    #allocation13 [shape = 's32[2]{0}', space=sflag, size = 0x8, scoped, tag = 'scoped memory for tpu_custom_call.1']
    #allocation14 [shape = 'u8[1024]{0}', space=vmem, size = 0x400, scoped, tag = 'input window, operand 6']
    #allocation15 [shape = 'u8[1024]{0}', space=vmem, size = 0x400, scoped, tag = 'input window, operand 7']
    #allocation16 [shape = 's32[2]{0}', space=sflag, size = 0x8, scoped, tag = 'scoped memory for tpu_custom_call.1']
    #allocation17 [shape = 'u8[1024]{0}', space=vmem, size = 0x400, scoped, tag = 'input window, operand 8']
    #allocation18 [shape = 'u8[262144]{0}', space=vmem, size = 0x40000, scoped, tag = 'input window, operand 9']
    #allocation19 [shape = 's32[2]{0}', space=sflag, size = 0x8, scoped, tag = 'scoped memory for tpu_custom_call.1']
    #allocation20 [shape = 'u8[262144]{0}', space=vmem, size = 0x40000, scoped, tag = 'input window, operand 11']
    #allocation21 [shape = 'u8[1024]{0}', space=vmem, size = 0x400, scoped, tag = 'input window, operand 14']
    #allocation22 [shape = 's32[2]{0}', space=sflag, size = 0x8, scoped, tag = 'scoped memory for tpu_custom_call.1']
    #allocation23 [shape = 'u8[32768]{0}', space=vmem, size = 0x8000, scoped, tag = 'input window, operand 15, single buffered']
    #allocation24 [shape = 'u8[32768]{0}', space=vmem, size = 0x8000, scoped, tag = 'input window, operand 17, single buffered']
    #allocation25 [shape = 's32[1]{0}', space=sflag, size = 0x4, scoped, tag = 'scoped memory for tpu_custom_call.1']
    #allocation26 [shape = 'u8[1024]{0}', space=vmem, size = 0x400, scoped, tag = 'output window, operand 0, single buffered']
    %24 = vsyncpa [#allocation4], 0
    %25 = vsyncpa [#allocation7], 0
    %26 = vsyncpa [#allocation10], 0
    %s27 = scalar_lea.sflag [#allocation10], 1
    %28 = vsyncpa %s27, 0
    %29 = vsyncpa [#allocation13], 0
    %s30 = scalar_lea.sflag [#allocation13], 1
    %31 = vsyncpa %s30, 0
    %32 = vsyncpa [#allocation16], 0
    %s33 = scalar_lea.sflag [#allocation16], 1
    %34 = vsyncpa %s33, 0
    %35 = vsyncpa [#allocation19], 0
    %s36 = scalar_lea.sflag [#allocation19], 1
    %37 = vsyncpa %s36, 0
    %38 = vsyncpa [#allocation22], 0
    %s39 = scalar_lea.sflag [#allocation22], 1
    %40 = vsyncpa %s39, 0
    %41 = vsyncpa [#allocation25], 0
    %42 = vsyncpa [#allocation5], 0
    loop: start=0, step=1, limit=4
    $region2: #{tpu_custom_call.1} parent=1 // loop_pre_header
      _
    $region3: #{tpu_custom_call.1} parent=1 // loop_header
      %s44 = sphi 0, %s48
      %p45 = scmp.ge.s32.totalorder %s44, 4
      %s52 = sphi 0, %s52
      %s54 = sphi 0, %s52
      %s55 = sphi 0, %s54
      %s69 = sphi 0, %s55
      %s73 = sphi 0, %s73
      %s75 = sphi 0, %s73
      %s76 = sphi 0, %s75
      %s90 = sphi 0, %s76
      %s94 = sphi 0, %s94
      %s96 = sphi 0, %s94
      %s97 = sphi 0, %s96
      %s111 = sphi 0, %s97
      %s117 = sphi 0, %s119
      %s120 = sphi 0, %s117
      %s121 = sphi 0, %s120
      %s137 = sphi 0, %s121
      %s143 = sphi 0, %s145
      %s146 = sphi 0, %s143
      %s147 = sphi 0, %s146
      %s163 = sphi 0, %s147
      %s169 = sphi 0, %s171
      %s172 = sphi 0, %s169
      %s173 = sphi 0, %s172
      %s189 = sphi 0, %s173
      %s195 = sphi 0, %s197
      %s198 = sphi 0, %s195
      %s199 = sphi 0, %s198
      %s215 = sphi 0, %s199
      %s221 = sphi 0, %s223
      %s224 = sphi 0, %s221
      %s225 = sphi 0, %s224
      %s241 = sphi 0, %s225
      %s247 = sphi 0, %s249
      %s250 = sphi 0, %s247
      %s251 = sphi 0, %s250
      %s267 = sphi 0, %s251
      %s273 = sphi 0, %s275
      %s276 = sphi 0, %s273
      %s277 = sphi 0, %s276
      %s293 = sphi 0, %s277
      %s299 = sphi 0, %s301
      %s302 = sphi 0, %s299
      %s303 = sphi 0, %s302
      %s319 = sphi 0, %s303
      %s325 = sphi 0, %s327
      %s328 = sphi 0, %s325
      %s329 = sphi 0, %s328
      %s345 = sphi 0, %s329
      %s351 = sphi 0, %s353
      %s354 = sphi 0, %s351
      %s355 = sphi 0, %s354
      %s371 = sphi 0, %s355
      %s377 = sphi 0, %s379
      %s380 = sphi 0, %s377
      %s381 = sphi 0, %s380
      %s397 = sphi 0, %s381
      %s403 = sphi 0, %s405
      %s406 = sphi 0, %s403
      %s407 = sphi 0, %s406
      %s423 = sphi 0, %s407
      %s427 = sphi 0, %s427
      %s429 = sphi 0, %s427
      %s430 = sphi 0, %s429
      %s444 = sphi 0, %s430
      %s448 = sphi 0, %s448
      %s450 = sphi 0, %s448
      %s451 = sphi 0, %s450
      %s465 = sphi 0, %s451
      %s469 = sphi 0, %s469
      %s471 = sphi 0, %s469
      %s472 = sphi 0, %s471
      %s486 = sphi 0, %s472
      %s490 = sphi 0, %s490
      %s492 = sphi 0, %s490
      %s493 = sphi 0, %s492
      %s507 = sphi 0, %s493
      %s511 = sphi 0, %s511
      %s513 = sphi 0, %s511
      %s514 = sphi 0, %s513
      %s528 = sphi 0, %s514
    $region4: #{tpu_custom_call.1} parent=1 // loop_header_branch
      %47 = sbr.rel (%p45) target = $region8
    $region5: #{tpu_custom_call.1} parent=1 // loop_body
      %s49 = ssub.s32 %s44, 1
      %s50 = ssub.s32 %s44, 2
      %s51 = sadd.s32 %s44, 1
      %s53 = sadd.s32 %s52, 1
      %p56 = scmp.eq.s32.totalorder %s44, 1
      %p57 = scmp.ne.s32.totalorder %s52, %s54
      %p58 = scmp.eq.s32.totalorder %s44, 0
      %p59 = por %p57, %p58
      %p60 = scmp.ne.s32.totalorder %s52, %s54
      %p61 = scmp.eq.s32.totalorder %s49, 1
      %p62 = por %p60, %p61
      %p63 = scmp.ne.s32.totalorder %s54, %s55
      %p64 = scmp.eq.s32.totalorder %s49, 0
      %p65 = por %p63, %p64
      %p66 = scmp.ne.s32.totalorder %s54, %s55
      %p67 = scmp.eq.s32.totalorder %s50, 1
      %p68 = por %p66, %p67
      %p70 = scmp.ne.s32.totalorder %s55, %s69
      %p71 = scmp.eq.s32.totalorder %s50, 0
      %p72 = por %p70, %p71
      %s74 = sadd.s32 %s73, 1
      %p77 = scmp.eq.s32.totalorder %s44, 1
      %p78 = scmp.ne.s32.totalorder %s73, %s75
      %p79 = scmp.eq.s32.totalorder %s44, 0
      %p80 = por %p78, %p79
      %p81 = scmp.ne.s32.totalorder %s73, %s75
      %p82 = scmp.eq.s32.totalorder %s49, 1
      %p83 = por %p81, %p82
      %p84 = scmp.ne.s32.totalorder %s75, %s76
      %p85 = scmp.eq.s32.totalorder %s49, 0
      %p86 = por %p84, %p85
      %p87 = scmp.ne.s32.totalorder %s75, %s76
      %p88 = scmp.eq.s32.totalorder %s50, 1
      %p89 = por %p87, %p88
      %p91 = scmp.ne.s32.totalorder %s76, %s90
      %p92 = scmp.eq.s32.totalorder %s50, 0
      %p93 = por %p91, %p92
      %s95 = sadd.s32 %s94, 1
      %p98 = scmp.eq.s32.totalorder %s44, 1
      %p99 = scmp.ne.s32.totalorder %s94, %s96
      %p100 = scmp.eq.s32.totalorder %s44, 0
      %p101 = por %p99, %p100
      %p102 = scmp.ne.s32.totalorder %s94, %s96
      %p103 = scmp.eq.s32.totalorder %s49, 1
      %p104 = por %p102, %p103
      %p105 = scmp.ne.s32.totalorder %s96, %s97
      %p106 = scmp.eq.s32.totalorder %s49, 0
      %p107 = por %p105, %p106
      %p108 = scmp.ne.s32.totalorder %s96, %s97
      %p109 = scmp.eq.s32.totalorder %s50, 1
      %p110 = por %p108, %p109
      %p112 = scmp.ne.s32.totalorder %s97, %s111
      %p113 = scmp.eq.s32.totalorder %s50, 0
      %p114 = por %p112, %p113
      %s115 = ssub.s32 %s44, %s51
      %p116 = scmp.eq.s32.totalorder %s115, 0
      %s118 = sadd.s32 %s117, 1
      %s119 = scalar_select %p116, %s117, %s118
      %p122 = pneg %p116
      %p123 = scmp.eq.s32.totalorder %s44, 1
      %p124 = por %p122, %p123
      %p125 = scmp.ne.s32.totalorder %s117, %s120
      %p126 = scmp.eq.s32.totalorder %s44, 0
      %p127 = por %p125, %p126
      %p128 = scmp.ne.s32.totalorder %s117, %s120
      %p129 = scmp.eq.s32.totalorder %s49, 1
      %p130 = por %p128, %p129
      %p131 = scmp.ne.s32.totalorder %s120, %s121
      %p132 = scmp.eq.s32.totalorder %s49, 0
      %p133 = por %p131, %p132
      %p134 = scmp.ne.s32.totalorder %s120, %s121
      %p135 = scmp.eq.s32.totalorder %s50, 1
      %p136 = por %p134, %p135
      %p138 = scmp.ne.s32.totalorder %s121, %s137
      %p139 = scmp.eq.s32.totalorder %s50, 0
      %p140 = por %p138, %p139
      %s141 = ssub.s32 %s44, %s51
      %p142 = scmp.eq.s32.totalorder %s141, 0
      %s144 = sadd.s32 %s143, 1
      %s145 = scalar_select %p142, %s143, %s144
      %p148 = pneg %p142
      %p149 = scmp.eq.s32.totalorder %s44, 1
      %p150 = por %p148, %p149
      %p151 = scmp.ne.s32.totalorder %s143, %s146
      %p152 = scmp.eq.s32.totalorder %s44, 0
      %p153 = por %p151, %p152
      %p154 = scmp.ne.s32.totalorder %s143, %s146
      %p155 = scmp.eq.s32.totalorder %s49, 1
      %p156 = por %p154, %p155
      %p157 = scmp.ne.s32.totalorder %s146, %s147
      %p158 = scmp.eq.s32.totalorder %s49, 0
      %p159 = por %p157, %p158
      %p160 = scmp.ne.s32.totalorder %s146, %s147
      %p161 = scmp.eq.s32.totalorder %s50, 1
      %p162 = por %p160, %p161
      %p164 = scmp.ne.s32.totalorder %s147, %s163
      %p165 = scmp.eq.s32.totalorder %s50, 0
      %p166 = por %p164, %p165
      %s167 = ssub.s32 %s44, %s51
      %p168 = scmp.eq.s32.totalorder %s167, 0
      %s170 = sadd.s32 %s169, 1
      %s171 = scalar_select %p168, %s169, %s170
      %p174 = pneg %p168
      %p175 = scmp.eq.s32.totalorder %s44, 1
      %p176 = por %p174, %p175
      %p177 = scmp.ne.s32.totalorder %s169, %s172
      %p178 = scmp.eq.s32.totalorder %s44, 0
      %p179 = por %p177, %p178
      %p180 = scmp.ne.s32.totalorder %s169, %s172
      %p181 = scmp.eq.s32.totalorder %s49, 1
      %p182 = por %p180, %p181
      %p183 = scmp.ne.s32.totalorder %s172, %s173
      %p184 = scmp.eq.s32.totalorder %s49, 0
      %p185 = por %p183, %p184
      %p186 = scmp.ne.s32.totalorder %s172, %s173
      %p187 = scmp.eq.s32.totalorder %s50, 1
      %p188 = por %p186, %p187
      %p190 = scmp.ne.s32.totalorder %s173, %s189
      %p191 = scmp.eq.s32.totalorder %s50, 0
      %p192 = por %p190, %p191
      %s193 = ssub.s32 %s44, %s51
      %p194 = scmp.eq.s32.totalorder %s193, 0
      %s196 = sadd.s32 %s195, 1
      %s197 = scalar_select %p194, %s195, %s196
      %p200 = pneg %p194
      %p201 = scmp.eq.s32.totalorder %s44, 1
      %p202 = por %p200, %p201
      %p203 = scmp.ne.s32.totalorder %s195, %s198
      %p204 = scmp.eq.s32.totalorder %s44, 0
      %p205 = por %p203, %p204
      %p206 = scmp.ne.s32.totalorder %s195, %s198
      %p207 = scmp.eq.s32.totalorder %s49, 1
      %p208 = por %p206, %p207
      %p209 = scmp.ne.s32.totalorder %s198, %s199
      %p210 = scmp.eq.s32.totalorder %s49, 0
      %p211 = por %p209, %p210
      %p212 = scmp.ne.s32.totalorder %s198, %s199
      %p213 = scmp.eq.s32.totalorder %s50, 1
      %p214 = por %p212, %p213
      %p216 = scmp.ne.s32.totalorder %s199, %s215
      %p217 = scmp.eq.s32.totalorder %s50, 0
      %p218 = por %p216, %p217
      %s219 = ssub.s32 %s44, %s51
      %p220 = scmp.eq.s32.totalorder %s219, 0
      %s222 = sadd.s32 %s221, 1
      %s223 = scalar_select %p220, %s221, %s222
      %p226 = pneg %p220
      %p227 = scmp.eq.s32.totalorder %s44, 1
      %p228 = por %p226, %p227
      %p229 = scmp.ne.s32.totalorder %s221, %s224
      %p230 = scmp.eq.s32.totalorder %s44, 0
      %p231 = por %p229, %p230
      %p232 = scmp.ne.s32.totalorder %s221, %s224
      %p233 = scmp.eq.s32.totalorder %s49, 1
      %p234 = por %p232, %p233
      %p235 = scmp.ne.s32.totalorder %s224, %s225
      %p236 = scmp.eq.s32.totalorder %s49, 0
      %p237 = por %p235, %p236
      %p238 = scmp.ne.s32.totalorder %s224, %s225
      %p239 = scmp.eq.s32.totalorder %s50, 1
      %p240 = por %p238, %p239
      %p242 = scmp.ne.s32.totalorder %s225, %s241
      %p243 = scmp.eq.s32.totalorder %s50, 0
      %p244 = por %p242, %p243
      %s245 = ssub.s32 %s44, %s51
      %p246 = scmp.eq.s32.totalorder %s245, 0
      %s248 = sadd.s32 %s247, 1
      %s249 = scalar_select %p246, %s247, %s248
      %p252 = pneg %p246
      %p253 = scmp.eq.s32.totalorder %s44, 1
      %p254 = por %p252, %p253
      %p255 = scmp.ne.s32.totalorder %s247, %s250
      %p256 = scmp.eq.s32.totalorder %s44, 0
      %p257 = por %p255, %p256
      %p258 = scmp.ne.s32.totalorder %s247, %s250
      %p259 = scmp.eq.s32.totalorder %s49, 1
      %p260 = por %p258, %p259
      %p261 = scmp.ne.s32.totalorder %s250, %s251
      %p262 = scmp.eq.s32.totalorder %s49, 0
      %p263 = por %p261, %p262
      %p264 = scmp.ne.s32.totalorder %s250, %s251
      %p265 = scmp.eq.s32.totalorder %s50, 1
      %p266 = por %p264, %p265
      %p268 = scmp.ne.s32.totalorder %s251, %s267
      %p269 = scmp.eq.s32.totalorder %s50, 0
      %p270 = por %p268, %p269
      %s271 = ssub.s32 %s44, %s51
      %p272 = scmp.eq.s32.totalorder %s271, 0
      %s274 = sadd.s32 %s273, 1
      %s275 = scalar_select %p272, %s273, %s274
      %p278 = pneg %p272
      %p279 = scmp.eq.s32.totalorder %s44, 1
      %p280 = por %p278, %p279
      %p281 = scmp.ne.s32.totalorder %s273, %s276
      %p282 = scmp.eq.s32.totalorder %s44, 0
      %p283 = por %p281, %p282
      %p284 = scmp.ne.s32.totalorder %s273, %s276
      %p285 = scmp.eq.s32.totalorder %s49, 1
      %p286 = por %p284, %p285
      %p287 = scmp.ne.s32.totalorder %s276, %s277
      %p288 = scmp.eq.s32.totalorder %s49, 0
      %p289 = por %p287, %p288
      %p290 = scmp.ne.s32.totalorder %s276, %s277
      %p291 = scmp.eq.s32.totalorder %s50, 1
      %p292 = por %p290, %p291
      %p294 = scmp.ne.s32.totalorder %s277, %s293
      %p295 = scmp.eq.s32.totalorder %s50, 0
      %p296 = por %p294, %p295
      %s297 = ssub.s32 %s44, %s51
      %p298 = scmp.eq.s32.totalorder %s297, 0
      %s300 = sadd.s32 %s299, 1
      %s301 = scalar_select %p298, %s299, %s300
      %p304 = pneg %p298
      %p305 = scmp.eq.s32.totalorder %s44, 1
      %p306 = por %p304, %p305
      %p307 = scmp.ne.s32.totalorder %s299, %s302
      %p308 = scmp.eq.s32.totalorder %s44, 0
      %p309 = por %p307, %p308
      %p310 = scmp.ne.s32.totalorder %s299, %s302
      %p311 = scmp.eq.s32.totalorder %s49, 1
      %p312 = por %p310, %p311
      %p313 = scmp.ne.s32.totalorder %s302, %s303
      %p314 = scmp.eq.s32.totalorder %s49, 0
      %p315 = por %p313, %p314
      %p316 = scmp.ne.s32.totalorder %s302, %s303
      %p317 = scmp.eq.s32.totalorder %s50, 1
      %p318 = por %p316, %p317
      %p320 = scmp.ne.s32.totalorder %s303, %s319
      %p321 = scmp.eq.s32.totalorder %s50, 0
      %p322 = por %p320, %p321
      %s323 = ssub.s32 %s44, %s51
      %p324 = scmp.eq.s32.totalorder %s323, 0
      %s326 = sadd.s32 %s325, 1
      %s327 = scalar_select %p324, %s325, %s326
      %p330 = pneg %p324
      %p331 = scmp.eq.s32.totalorder %s44, 1
      %p332 = por %p330, %p331
      %p333 = scmp.ne.s32.totalorder %s325, %s328
      %p334 = scmp.eq.s32.totalorder %s44, 0
      %p335 = por %p333, %p334
      %p336 = scmp.ne.s32.totalorder %s325, %s328
      %p337 = scmp.eq.s32.totalorder %s49, 1
      %p338 = por %p336, %p337
      %p339 = scmp.ne.s32.totalorder %s328, %s329
      %p340 = scmp.eq.s32.totalorder %s49, 0
      %p341 = por %p339, %p340
      %p342 = scmp.ne.s32.totalorder %s328, %s329
      %p343 = scmp.eq.s32.totalorder %s50, 1
      %p344 = por %p342, %p343
      %p346 = scmp.ne.s32.totalorder %s329, %s345
      %p347 = scmp.eq.s32.totalorder %s50, 0
      %p348 = por %p346, %p347
      %s349 = ssub.s32 %s44, %s51
      %p350 = scmp.eq.s32.totalorder %s349, 0
      %s352 = sadd.s32 %s351, 1
      %s353 = scalar_select %p350, %s351, %s352
      %p356 = pneg %p350
      %p357 = scmp.eq.s32.totalorder %s44, 1
      %p358 = por %p356, %p357
      %p359 = scmp.ne.s32.totalorder %s351, %s354
      %p360 = scmp.eq.s32.totalorder %s44, 0
      %p361 = por %p359, %p360
      %p362 = scmp.ne.s32.totalorder %s351, %s354
      %p363 = scmp.eq.s32.totalorder %s49, 1
      %p364 = por %p362, %p363
      %p365 = scmp.ne.s32.totalorder %s354, %s355
      %p366 = scmp.eq.s32.totalorder %s49, 0
      %p367 = por %p365, %p366
      %p368 = scmp.ne.s32.totalorder %s354, %s355
      %p369 = scmp.eq.s32.totalorder %s50, 1
      %p370 = por %p368, %p369
      %p372 = scmp.ne.s32.totalorder %s355, %s371
      %p373 = scmp.eq.s32.totalorder %s50, 0
      %p374 = por %p372, %p373
      %s375 = ssub.s32 %s44, %s51
      %p376 = scmp.eq.s32.totalorder %s375, 0
      %s378 = sadd.s32 %s377, 1
      %s379 = scalar_select %p376, %s377, %s378
      %p382 = pneg %p376
      %p383 = scmp.eq.s32.totalorder %s44, 1
      %p384 = por %p382, %p383
      %p385 = scmp.ne.s32.totalorder %s377, %s380
      %p386 = scmp.eq.s32.totalorder %s44, 0
      %p387 = por %p385, %p386
      %p388 = scmp.ne.s32.totalorder %s377, %s380
      %p389 = scmp.eq.s32.totalorder %s49, 1
      %p390 = por %p388, %p389
      %p391 = scmp.ne.s32.totalorder %s380, %s381
      %p392 = scmp.eq.s32.totalorder %s49, 0
      %p393 = por %p391, %p392
      %p394 = scmp.ne.s32.totalorder %s380, %s381
      %p395 = scmp.eq.s32.totalorder %s50, 1
      %p396 = por %p394, %p395
      %p398 = scmp.ne.s32.totalorder %s381, %s397
      %p399 = scmp.eq.s32.totalorder %s50, 0
      %p400 = por %p398, %p399
      %s401 = ssub.s32 %s44, %s51
      %p402 = scmp.eq.s32.totalorder %s401, 0
      %s404 = sadd.s32 %s403, 1
      %s405 = scalar_select %p402, %s403, %s404
      %p408 = pneg %p402
      %p409 = scmp.eq.s32.totalorder %s44, 1
      %p410 = por %p408, %p409
      %p411 = scmp.ne.s32.totalorder %s403, %s406
      %p412 = scmp.eq.s32.totalorder %s44, 0
      %p413 = por %p411, %p412
      %p414 = scmp.ne.s32.totalorder %s403, %s406
      %p415 = scmp.eq.s32.totalorder %s49, 1
      %p416 = por %p414, %p415
      %p417 = scmp.ne.s32.totalorder %s406, %s407
      %p418 = scmp.eq.s32.totalorder %s49, 0
      %p419 = por %p417, %p418
      %p420 = scmp.ne.s32.totalorder %s406, %s407
      %p421 = scmp.eq.s32.totalorder %s50, 1
      %p422 = por %p420, %p421
      %p424 = scmp.ne.s32.totalorder %s407, %s423
      %p425 = scmp.eq.s32.totalorder %s50, 0
      %p426 = por %p424, %p425
      %s428 = sadd.s32 %s427, 1
      %p431 = scmp.eq.s32.totalorder %s44, 1
      %p432 = scmp.ne.s32.totalorder %s427, %s429
      %p433 = scmp.eq.s32.totalorder %s44, 0
      %p434 = por %p432, %p433
      %p435 = scmp.ne.s32.totalorder %s427, %s429
      %p436 = scmp.eq.s32.totalorder %s49, 1
      %p437 = por %p435, %p436
      %p438 = scmp.ne.s32.totalorder %s429, %s430
      %p439 = scmp.eq.s32.totalorder %s49, 0
      %p440 = por %p438, %p439
      %p441 = scmp.ne.s32.totalorder %s429, %s430
      %p442 = scmp.eq.s32.totalorder %s50, 1
      %p443 = por %p441, %p442
      %p445 = scmp.ne.s32.totalorder %s430, %s444
      %p446 = scmp.eq.s32.totalorder %s50, 0
      %p447 = por %p445, %p446
      %s449 = sadd.s32 %s448, 1
      %p452 = scmp.eq.s32.totalorder %s44, 1
      %p453 = scmp.ne.s32.totalorder %s448, %s450
      %p454 = scmp.eq.s32.totalorder %s44, 0
      %p455 = por %p453, %p454
      %p456 = scmp.ne.s32.totalorder %s448, %s450
      %p457 = scmp.eq.s32.totalorder %s49, 1
      %p458 = por %p456, %p457
      %p459 = scmp.ne.s32.totalorder %s450, %s451
      %p460 = scmp.eq.s32.totalorder %s49, 0
      %p461 = por %p459, %p460
      %p462 = scmp.ne.s32.totalorder %s450, %s451
      %p463 = scmp.eq.s32.totalorder %s50, 1
      %p464 = por %p462, %p463
      %p466 = scmp.ne.s32.totalorder %s451, %s465
      %p467 = scmp.eq.s32.totalorder %s50, 0
      %p468 = por %p466, %p467
      %s470 = sadd.s32 %s469, 1
      %p473 = scmp.eq.s32.totalorder %s44, 1
      %p474 = scmp.ne.s32.totalorder %s469, %s471
      %p475 = scmp.eq.s32.totalorder %s44, 0
      %p476 = por %p474, %p475
      %p477 = scmp.ne.s32.totalorder %s469, %s471
      %p478 = scmp.eq.s32.totalorder %s49, 1
      %p479 = por %p477, %p478
      %p480 = scmp.ne.s32.totalorder %s471, %s472
      %p481 = scmp.eq.s32.totalorder %s49, 0
      %p482 = por %p480, %p481
      %p483 = scmp.ne.s32.totalorder %s471, %s472
      %p484 = scmp.eq.s32.totalorder %s50, 1
      %p485 = por %p483, %p484
      %p487 = scmp.ne.s32.totalorder %s472, %s486
      %p488 = scmp.eq.s32.totalorder %s50, 0
      %p489 = por %p487, %p488
      %s491 = sadd.s32 %s490, 1
      %p494 = scmp.eq.s32.totalorder %s44, 1
      %p495 = scmp.ne.s32.totalorder %s490, %s492
      %p496 = scmp.eq.s32.totalorder %s44, 0
      %p497 = por %p495, %p496
      %p498 = scmp.ne.s32.totalorder %s490, %s492
      %p499 = scmp.eq.s32.totalorder %s49, 1
      %p500 = por %p498, %p499
      %p501 = scmp.ne.s32.totalorder %s492, %s493
      %p502 = scmp.eq.s32.totalorder %s49, 0
      %p503 = por %p501, %p502
      %p504 = scmp.ne.s32.totalorder %s492, %s493
      %p505 = scmp.eq.s32.totalorder %s50, 1
      %p506 = por %p504, %p505
      %p508 = scmp.ne.s32.totalorder %s493, %s507
      %p509 = scmp.eq.s32.totalorder %s50, 0
      %p510 = por %p508, %p509
      %s512 = sadd.s32 %s511, 1
      %p515 = scmp.eq.s32.totalorder %s44, 1
      %p516 = scmp.ne.s32.totalorder %s511, %s513
      %p517 = scmp.eq.s32.totalorder %s44, 0
      %p518 = por %p516, %p517
      %p519 = scmp.ne.s32.totalorder %s511, %s513
      %p520 = scmp.eq.s32.totalorder %s49, 1
      %p521 = por %p519, %p520
      %p522 = scmp.ne.s32.totalorder %s513, %s514
      %p523 = scmp.eq.s32.totalorder %s49, 0
      %p524 = por %p522, %p523
      %p525 = scmp.ne.s32.totalorder %s513, %s514
      %p526 = scmp.eq.s32.totalorder %s50, 1
      %p527 = por %p525, %p526
      %p529 = scmp.ne.s32.totalorder %s514, %s528
      %p530 = scmp.eq.s32.totalorder %s50, 0
      %p531 = por %p529, %p530
      %p532 = scmp.le.s32.totalorder 1, %s44
      %p533 = scmp.lt.s32.totalorder %s44, 3
      %p534 = pnand %p532, %p533
      %p535 = pneg %p534
      // Predicated region
      $region9: #{tpu_custom_call.1} parent=5 // pred_check
        _
      $region10: #{tpu_custom_call.1} parent=5 // pred_check_branch
        %537 = sbr.rel (%p534) target = $region12
      $region11: #{tpu_custom_call.1} parent=5 // pred_region
        %s538 = ssub.s32 %s44, 1
        // Predicated region
        $region13: #{tpu_custom_call.1} parent=11 // pred_check
          %p539 = pneg %p65
        $region14: #{tpu_custom_call.1} parent=11 // pred_check_branch
          %541 = sbr.rel (%p539) target = $region16
        $region15: #{tpu_custom_call.1} parent=11 // pred_region
          %543 = vsyncadd [#allocation4], 0
          %s544 = sshll.u32 %s0, 4
          %s545 = int_to_ptr.hbm [resolvable:$true] %s544
          %s546 = sshll.u32 [#allocation3], 4
          %s547 = int_to_ptr.vmem [resolvable:$true] %s546
          %552 = dma.hbm_to_vmem [thread:$0]  %s545, 256, %s547, [#allocation4], 128, 128, 8
        $region16: #{tpu_custom_call.1} parent=11 // pred_fallthru
          _
        // Predicated region
        $region17: #{tpu_custom_call.1} parent=11 // pred_check
          %p553 = pneg %p86
        $region18: #{tpu_custom_call.1} parent=11 // pred_check_branch
          %555 = sbr.rel (%p553) target = $region20
        $region19: #{tpu_custom_call.1} parent=11 // pred_region
          %557 = vsyncadd [#allocation7], 0
          %s558 = sshll.u32 %s1, 4
          %s559 = int_to_ptr.hbm [resolvable:$true] %s558
          %s560 = sshll.u32 [#allocation6], 4
          %s561 = int_to_ptr.vmem [resolvable:$true] %s560
          %566 = dma.hbm_to_vmem [thread:$0]  %s559, 256, %s561, [#allocation7], 128, 128, 8
        $region20: #{tpu_custom_call.1} parent=11 // pred_fallthru
          _
        // Predicated region
        $region21: #{tpu_custom_call.1} parent=11 // pred_check
          %p567 = pneg %p107
        $region22: #{tpu_custom_call.1} parent=11 // pred_check_branch
          %569 = sbr.rel (%p567) target = $region24
        $region23: #{tpu_custom_call.1} parent=11 // pred_region
          %571 = vsyncadd [#allocation7], 0
          %s572 = sshll.u32 %s2, 4
          %s573 = int_to_ptr.hbm [resolvable:$true] %s572
          %s574 = sshll.u32 [#allocation8], 4
          %s575 = int_to_ptr.vmem [resolvable:$true] %s574
          %580 = dma.hbm_to_vmem [thread:$0]  %s573, 64, %s575, [#allocation7], 16, 16, 1
        $region24: #{tpu_custom_call.1} parent=11 // pred_fallthru
          _
        // Predicated region
        $region25: #{tpu_custom_call.1} parent=11 // pred_check
          %p581 = pneg %p440
        $region26: #{tpu_custom_call.1} parent=11 // pred_check_branch
          %583 = sbr.rel (%p581) target = $region28
        $region27: #{tpu_custom_call.1} parent=11 // pred_region
          %585 = vsyncadd [#allocation22], 0
          %s586 = sshll.u32 %s15, 4
          %s587 = int_to_ptr.hbm [resolvable:$true] %s586
          %s588 = sshll.u32 [#allocation23], 4
          %s589 = int_to_ptr.vmem [resolvable:$true] %s588
          %594 = dma.hbm_to_vmem [thread:$0]  %s587, 1024, %s589, [#allocation22], 64, 64, 4
        $region28: #{tpu_custom_call.1} parent=11 // pred_fallthru
          _
        // Predicated region
        $region29: #{tpu_custom_call.1} parent=11 // pred_check
          %p595 = pneg %p461
        $region30: #{tpu_custom_call.1} parent=11 // pred_check_branch
          %597 = sbr.rel (%p595) target = $region32
        $region31: #{tpu_custom_call.1} parent=11 // pred_region
          _
        $region32: #{tpu_custom_call.1} parent=11 // pred_fallthru
          _
        // Predicated region
        $region33: #{tpu_custom_call.1} parent=11 // pred_check
          %p598 = pneg %p482
        $region34: #{tpu_custom_call.1} parent=11 // pred_check_branch
          %600 = sbr.rel (%p598) target = $region36
        $region35: #{tpu_custom_call.1} parent=11 // pred_region
          %602 = vsyncadd [#allocation25], 0
          %s603 = sshll.u32 %s17, 4
          %s604 = int_to_ptr.hbm [resolvable:$true] %s603
          %s605 = sshll.u32 [#allocation24], 4
          %s606 = int_to_ptr.vmem [resolvable:$true] %s605
          %611 = dma.hbm_to_vmem [thread:$0]  %s604, 1024, %s606, [#allocation25], 64, 64, 4
        $region36: #{tpu_custom_call.1} parent=11 // pred_fallthru
          _
        // Predicated region
        $region37: #{tpu_custom_call.1} parent=11 // pred_check
          %p612 = pneg %p503
        $region38: #{tpu_custom_call.1} parent=11 // pred_check_branch
          %614 = sbr.rel (%p612) target = $region40
        $region39: #{tpu_custom_call.1} parent=11 // pred_region
          _
        $region40: #{tpu_custom_call.1} parent=11 // pred_fallthru
          _
      $region12: #{tpu_custom_call.1} parent=5 // pred_fallthru
        _
      %p615 = scmp.lt.s32.totalorder %s44, 2
      // Predicated region
      $region41: #{tpu_custom_call.1} parent=5 // pred_check
        %p616 = pneg %p615
      $region42: #{tpu_custom_call.1} parent=5 // pred_check_branch
        %618 = sbr.rel (%p616) target = $region44
      $region43: #{tpu_custom_call.1} parent=5 // pred_region
        // Predicated region
        $region45: #{tpu_custom_call.1} parent=43 // pred_check
          %p619 = pneg %p127
        $region46: #{tpu_custom_call.1} parent=43 // pred_check_branch
          %621 = sbr.rel (%p619) target = $region48
        $region47: #{tpu_custom_call.1} parent=43 // pred_region
          %s622 = sand.u32 %s44, 1
          %s623 = scalar_lea.sflag [#allocation10], %s622
          %s624 = sand.u32 %s117, 1
          %s625 = smul.addr %s624, 192
          %s626 = scalar_lea.vmem [#allocation9], %s625
          %628 = vsyncadd %s623, 0
          %s629 = smul.addr %s44, 48
          %s630 = smul.addr %s629, 4
          %s631 = scalar_lea.hbm %s3, %s630
          %s632 = sshll.u32 %s631, 4
          %s633 = int_to_ptr.hbm [resolvable:$true] %s632
          %s634 = sshll.u32 %s626, 4
          %s635 = int_to_ptr.vmem [resolvable:$true] %s634
          %640 = dma.hbm_to_vmem [thread:$0]  %s633, 3072, %s635, %s623, 192, 192, 12
        $region48: #{tpu_custom_call.1} parent=43 // pred_fallthru
          _
        // Predicated region
        $region49: #{tpu_custom_call.1} parent=43 // pred_check
          %p641 = pneg %p153
        $region50: #{tpu_custom_call.1} parent=43 // pred_check_branch
          %643 = sbr.rel (%p641) target = $region52
        $region51: #{tpu_custom_call.1} parent=43 // pred_region
          %s644 = sand.u32 %s44, 1
          %s645 = scalar_lea.sflag [#allocation10], %s644
          %s646 = sand.u32 %s143, 1
          %s647 = smul.addr %s646, 3
          %s648 = scalar_lea.vmem [#allocation11], %s647
          %650 = vsyncadd %s645, 0
          %s651 = smul.addr %s44, 3
          %s652 = scalar_lea.hbm %s4, %s651
          %s654 = sshll.u32 %s652, 4
          %s655 = int_to_ptr.hbm [resolvable:$true] %s654
          %s656 = sshll.u32 %s648, 4
          %s657 = int_to_ptr.vmem [resolvable:$true] %s656
          %659 = dma.hbm_to_vmem [thread:$0]  %s655, 48, %s657, %s645
        $region52: #{tpu_custom_call.1} parent=43 // pred_fallthru
          _
        // Predicated region
        $region53: #{tpu_custom_call.1} parent=43 // pred_check
          %p660 = pneg %p179
        $region54: #{tpu_custom_call.1} parent=43 // pred_check_branch
          %662 = sbr.rel (%p660) target = $region56
        $region55: #{tpu_custom_call.1} parent=43 // pred_region
          %s663 = sand.u32 %s44, 1
          %s664 = scalar_lea.sflag [#allocation13], %s663
          %s665 = sand.u32 %s169, 1
          %s666 = smul.addr %s665, 64
          %s667 = scalar_lea.vmem [#allocation12], %s666
          %669 = vsyncadd %s664, 0
          %s670 = smul.addr %s44, 16
          %s671 = smul.addr %s670, 4
          %s672 = scalar_lea.hbm %s5, %s671
          %s673 = sshll.u32 %s672, 4
          %s674 = int_to_ptr.hbm [resolvable:$true] %s673
          %s675 = sshll.u32 %s667, 4
          %s676 = int_to_ptr.vmem [resolvable:$true] %s675
          %681 = dma.hbm_to_vmem [thread:$0]  %s674, 1024, %s676, %s664, 64, 64, 4
        $region56: #{tpu_custom_call.1} parent=43 // pred_fallthru
          _
        // Predicated region
        $region57: #{tpu_custom_call.1} parent=43 // pred_check
          %p682 = pneg %p205
        $region58: #{tpu_custom_call.1} parent=43 // pred_check_branch
          %684 = sbr.rel (%p682) target = $region60
        $region59: #{tpu_custom_call.1} parent=43 // pred_region
          %s685 = sand.u32 %s44, 1
          %s686 = scalar_lea.sflag [#allocation13], %s685
          %s687 = sand.u32 %s195, 1
          %s688 = scalar_lea.vmem [#allocation14], %s687
          %690 = vsyncadd %s686, 0
          %s691 = scalar_lea.hbm %s6, %s44
          %s693 = sshll.u32 %s691, 4
          %s694 = int_to_ptr.hbm [resolvable:$true] %s693
          %s695 = sshll.u32 %s688, 4
          %s696 = int_to_ptr.vmem [resolvable:$true] %s695
          %698 = dma.hbm_to_vmem [thread:$0]  %s694, 16, %s696, %s686
        $region60: #{tpu_custom_call.1} parent=43 // pred_fallthru
          _
        // Predicated region
        $region61: #{tpu_custom_call.1} parent=43 // pred_check
          %p699 = pneg %p231
        $region62: #{tpu_custom_call.1} parent=43 // pred_check_branch
          %701 = sbr.rel (%p699) target = $region64
        $region63: #{tpu_custom_call.1} parent=43 // pred_region
          %s702 = sand.u32 %s44, 1
          %s703 = scalar_lea.sflag [#allocation16], %s702
          %s704 = sand.u32 %s221, 1
          %s705 = scalar_lea.vmem [#allocation15], %s704
          %707 = vsyncadd %s703, 0
          %s708 = scalar_lea.hbm %s7, %s44
          %s710 = sshll.u32 %s708, 4
          %s711 = int_to_ptr.hbm [resolvable:$true] %s710
          %s712 = sshll.u32 %s705, 4
          %s713 = int_to_ptr.vmem [resolvable:$true] %s712
          %715 = dma.hbm_to_vmem [thread:$0]  %s711, 16, %s713, %s703
        $region64: #{tpu_custom_call.1} parent=43 // pred_fallthru
          _
        // Predicated region
        $region65: #{tpu_custom_call.1} parent=43 // pred_check
          %p716 = pneg %p257
        $region66: #{tpu_custom_call.1} parent=43 // pred_check_branch
          %718 = sbr.rel (%p716) target = $region68
        $region67: #{tpu_custom_call.1} parent=43 // pred_region
          %s719 = sand.u32 %s44, 1
          %s720 = scalar_lea.sflag [#allocation16], %s719
          %s721 = sand.u32 %s247, 1
          %s722 = scalar_lea.vmem [#allocation17], %s721
          %724 = vsyncadd %s720, 0
          %s725 = scalar_lea.hbm %s8, %s44
          %s727 = sshll.u32 %s725, 4
          %s728 = int_to_ptr.hbm [resolvable:$true] %s727
          %s729 = sshll.u32 %s722, 4
          %s730 = int_to_ptr.vmem [resolvable:$true] %s729
          %732 = dma.hbm_to_vmem [thread:$0]  %s728, 16, %s730, %s720
        $region68: #{tpu_custom_call.1} parent=43 // pred_fallthru
          _
        // Predicated region
        $region69: #{tpu_custom_call.1} parent=43 // pred_check
          %p733 = pneg %p283
        $region70: #{tpu_custom_call.1} parent=43 // pred_check_branch
          %735 = sbr.rel (%p733) target = $region72
        $region71: #{tpu_custom_call.1} parent=43 // pred_region
          %s736 = sand.u32 %s44, 1
          %s737 = scalar_lea.sflag [#allocation19], %s736
          %s738 = sand.u32 %s273, 1
          %s739 = smul.addr %s738, 256
          %s740 = scalar_lea.vmem [#allocation18], %s739
          %742 = vsyncadd %s737, 0
          %s743 = smul.addr %s44, 64
          %s744 = smul.addr %s743, 4
          %s745 = scalar_lea.hbm %s9, %s744
          %s746 = sshll.u32 %s745, 4
          %s747 = int_to_ptr.hbm [resolvable:$true] %s746
          %s748 = sshll.u32 %s740, 4
          %s749 = int_to_ptr.vmem [resolvable:$true] %s748
          %754 = dma.hbm_to_vmem [thread:$0]  %s747, 4096, %s749, %s737, 256, 256, 16
        $region72: #{tpu_custom_call.1} parent=43 // pred_fallthru
          _
        // Predicated region
        $region73: #{tpu_custom_call.1} parent=43 // pred_check
          %p755 = pneg %p309
        $region74: #{tpu_custom_call.1} parent=43 // pred_check_branch
          %757 = sbr.rel (%p755) target = $region76
        $region75: #{tpu_custom_call.1} parent=43 // pred_region
          %p758 = scmp.lt.s32.totalorder %s44, 1
          %s759 = scalar_select %p758, %s44, 1
          %s760 = smul.addr %s759, 4
          %s761 = scalar_lea.vmem %s10, %s760
        $region76: #{tpu_custom_call.1} parent=43 // pred_fallthru
          _
        // Predicated region
        $region77: #{tpu_custom_call.1} parent=43 // pred_check
          %p762 = pneg %p335
        $region78: #{tpu_custom_call.1} parent=43 // pred_check_branch
          %764 = sbr.rel (%p762) target = $region80
        $region79: #{tpu_custom_call.1} parent=43 // pred_region
          %s765 = sand.u32 %s44, 1
          %s766 = scalar_lea.sflag [#allocation19], %s765
          %s767 = sand.u32 %s325, 1
          %s768 = smul.addr %s767, 256
          %s769 = scalar_lea.vmem [#allocation20], %s768
          %771 = vsyncadd %s766, 0
          %s772 = smul.addr %s44, 64
          %s773 = smul.addr %s772, 4
          %s774 = scalar_lea.hbm %s11, %s773
          %s775 = sshll.u32 %s774, 4
          %s776 = int_to_ptr.hbm [resolvable:$true] %s775
          %s777 = sshll.u32 %s769, 4
          %s778 = int_to_ptr.vmem [resolvable:$true] %s777
          %783 = dma.hbm_to_vmem [thread:$0]  %s776, 4096, %s778, %s766, 64, 64, 4
        $region80: #{tpu_custom_call.1} parent=43 // pred_fallthru
          _
        // Predicated region
        $region81: #{tpu_custom_call.1} parent=43 // pred_check
          %p784 = pneg %p361
        $region82: #{tpu_custom_call.1} parent=43 // pred_check_branch
          %786 = sbr.rel (%p784) target = $region84
        $region83: #{tpu_custom_call.1} parent=43 // pred_region
          %p787 = scmp.lt.s32.totalorder %s44, 1
          %s788 = scalar_select %p787, %s44, 1
          %s789 = scalar_lea.vmem %s12, %s788
        $region84: #{tpu_custom_call.1} parent=43 // pred_fallthru
          _
        // Predicated region
        $region85: #{tpu_custom_call.1} parent=43 // pred_check
          %p790 = pneg %p387
        $region86: #{tpu_custom_call.1} parent=43 // pred_check_branch
          %792 = sbr.rel (%p790) target = $region88
        $region87: #{tpu_custom_call.1} parent=43 // pred_region
          %p793 = scmp.lt.s32.totalorder %s44, 1
          %s794 = scalar_select %p793, %s44, 1
          %s795 = scalar_lea.vmem %s13, %s794
        $region88: #{tpu_custom_call.1} parent=43 // pred_fallthru
          _
        // Predicated region
        $region89: #{tpu_custom_call.1} parent=43 // pred_check
          %p796 = pneg %p413
        $region90: #{tpu_custom_call.1} parent=43 // pred_check_branch
          %798 = sbr.rel (%p796) target = $region92
        $region91: #{tpu_custom_call.1} parent=43 // pred_region
          %s799 = sand.u32 %s44, 1
          %s800 = scalar_lea.sflag [#allocation22], %s799
          %s801 = sand.u32 %s403, 1
          %s802 = scalar_lea.vmem [#allocation21], %s801
          %804 = vsyncadd %s800, 0
          %s805 = scalar_lea.hbm %s14, %s44
          %s807 = sshll.u32 %s805, 4
          %s808 = int_to_ptr.hbm [resolvable:$true] %s807
          %s809 = sshll.u32 %s802, 4
          %s810 = int_to_ptr.vmem [resolvable:$true] %s809
          %812 = dma.hbm_to_vmem [thread:$0]  %s808, 16, %s810, %s800
        $region92: #{tpu_custom_call.1} parent=43 // pred_fallthru
          _
      $region44: #{tpu_custom_call.1} parent=5 // pred_fallthru
        _
      %p813 = scmp.le.s32.totalorder 1, %s44
      %p814 = scmp.lt.s32.totalorder %s44, 3
      %p815 = pnand %p813, %p814
      %p816 = pneg %p815
      // Predicated region
      $region93: #{tpu_custom_call.1} parent=5 // pred_check
        _
      $region94: #{tpu_custom_call.1} parent=5 // pred_check_branch
        %818 = sbr.rel (%p815) target = $region96
      $region95: #{tpu_custom_call.1} parent=5 // pred_region
        %s819 = ssub.s32 %s44, 1
        // Predicated region
        $region97: #{tpu_custom_call.1} parent=95 // pred_check
          %p820 = pneg %p65
        $region98: #{tpu_custom_call.1} parent=95 // pred_check_branch
          %822 = sbr.rel (%p820) target = $region100
        $region99: #{tpu_custom_call.1} parent=95 // pred_region
          %824 = dma.done [#allocation4], 256
        $region100: #{tpu_custom_call.1} parent=95 // pred_fallthru
          _
        // Predicated region
        $region101: #{tpu_custom_call.1} parent=95 // pred_check
          %p825 = pneg %p86
        $region102: #{tpu_custom_call.1} parent=95 // pred_check_branch
          %827 = sbr.rel (%p825) target = $region104
        $region103: #{tpu_custom_call.1} parent=95 // pred_region
          %829 = dma.done [#allocation7], 256
        $region104: #{tpu_custom_call.1} parent=95 // pred_fallthru
          _
        // Predicated region
        $region105: #{tpu_custom_call.1} parent=95 // pred_check
          %p830 = pneg %p107
        $region106: #{tpu_custom_call.1} parent=95 // pred_check_branch
          %832 = sbr.rel (%p830) target = $region108
        $region107: #{tpu_custom_call.1} parent=95 // pred_region
          %834 = dma.done [#allocation7], 64
        $region108: #{tpu_custom_call.1} parent=95 // pred_fallthru
          _
        %s835 = sand.u32 %s49, 1
        %s836 = scalar_lea.sflag [#allocation10], %s835
        %s837 = sand.u32 %s120, 1
        %s838 = smul.addr %s837, 192
        %s839 = scalar_lea.vmem [#allocation9], %s838
        // Predicated region
        $region109: #{tpu_custom_call.1} parent=95 // pred_check
          %p840 = pneg %p133
        $region110: #{tpu_custom_call.1} parent=95 // pred_check_branch
          %842 = sbr.rel (%p840) target = $region112
        $region111: #{tpu_custom_call.1} parent=95 // pred_region
          %844 = dma.done %s836, 3072
        $region112: #{tpu_custom_call.1} parent=95 // pred_fallthru
          _
        %s845 = sand.u32 %s49, 1
        %s846 = scalar_lea.sflag [#allocation10], %s845
        %s847 = sand.u32 %s146, 1
        %s848 = smul.addr %s847, 3
        %s849 = scalar_lea.vmem [#allocation11], %s848
        // Predicated region
        $region113: #{tpu_custom_call.1} parent=95 // pred_check
          %p850 = pneg %p159
        $region114: #{tpu_custom_call.1} parent=95 // pred_check_branch
          %852 = sbr.rel (%p850) target = $region116
        $region115: #{tpu_custom_call.1} parent=95 // pred_region
          %854 = dma.done %s846, 48
        $region116: #{tpu_custom_call.1} parent=95 // pred_fallthru
          _
        %s855 = sand.u32 %s49, 1
        %s856 = scalar_lea.sflag [#allocation13], %s855
        %s857 = sand.u32 %s172, 1
        %s858 = smul.addr %s857, 64
        %s859 = scalar_lea.vmem [#allocation12], %s858
        // Predicated region
        $region117: #{tpu_custom_call.1} parent=95 // pred_check
          %p860 = pneg %p185
        $region118: #{tpu_custom_call.1} parent=95 // pred_check_branch
          %862 = sbr.rel (%p860) target = $region120
        $region119: #{tpu_custom_call.1} parent=95 // pred_region
          %864 = dma.done %s856, 1024
        $region120: #{tpu_custom_call.1} parent=95 // pred_fallthru
          _
        %s865 = sand.u32 %s49, 1
        %s866 = scalar_lea.sflag [#allocation13], %s865
        %s867 = sand.u32 %s198, 1
        %s868 = scalar_lea.vmem [#allocation14], %s867
        // Predicated region
        $region121: #{tpu_custom_call.1} parent=95 // pred_check
          %p869 = pneg %p211
        $region122: #{tpu_custom_call.1} parent=95 // pred_check_branch
          %871 = sbr.rel (%p869) target = $region124
        $region123: #{tpu_custom_call.1} parent=95 // pred_region
          %873 = dma.done %s866, 16
        $region124: #{tpu_custom_call.1} parent=95 // pred_fallthru
          _
        %s874 = sand.u32 %s49, 1
        %s875 = scalar_lea.sflag [#allocation16], %s874
        %s876 = sand.u32 %s224, 1
        %s877 = scalar_lea.vmem [#allocation15], %s876
        // Predicated region
        $region125: #{tpu_custom_call.1} parent=95 // pred_check
          %p878 = pneg %p237
        $region126: #{tpu_custom_call.1} parent=95 // pred_check_branch
          %880 = sbr.rel (%p878) target = $region128
        $region127: #{tpu_custom_call.1} parent=95 // pred_region
          %882 = dma.done %s875, 16
        $region128: #{tpu_custom_call.1} parent=95 // pred_fallthru
          _
        %s883 = sand.u32 %s49, 1
        %s884 = scalar_lea.sflag [#allocation16], %s883
        %s885 = sand.u32 %s250, 1
        %s886 = scalar_lea.vmem [#allocation17], %s885
        // Predicated region
        $region129: #{tpu_custom_call.1} parent=95 // pred_check
          %p887 = pneg %p263
        $region130: #{tpu_custom_call.1} parent=95 // pred_check_branch
          %889 = sbr.rel (%p887) target = $region132
        $region131: #{tpu_custom_call.1} parent=95 // pred_region
          %891 = dma.done %s884, 16
        $region132: #{tpu_custom_call.1} parent=95 // pred_fallthru
          _
        %s892 = sand.u32 %s49, 1
        %s893 = scalar_lea.sflag [#allocation19], %s892
        %s894 = sand.u32 %s276, 1
        %s895 = smul.addr %s894, 256
        %s896 = scalar_lea.vmem [#allocation18], %s895
        // Predicated region
        $region133: #{tpu_custom_call.1} parent=95 // pred_check
          %p897 = pneg %p289
        $region134: #{tpu_custom_call.1} parent=95 // pred_check_branch
          %899 = sbr.rel (%p897) target = $region136
        $region135: #{tpu_custom_call.1} parent=95 // pred_region
          %901 = dma.done %s893, 4096
        $region136: #{tpu_custom_call.1} parent=95 // pred_fallthru
          _
        %s902 = sand.u32 %s49, 1
        %s903 = scalar_lea.sflag [#allocation19], %s902
        %s904 = sand.u32 %s328, 1
        %s905 = smul.addr %s904, 256
        %s906 = scalar_lea.vmem [#allocation20], %s905
        // Predicated region
        $region137: #{tpu_custom_call.1} parent=95 // pred_check
          %p907 = pneg %p341
        $region138: #{tpu_custom_call.1} parent=95 // pred_check_branch
          %909 = sbr.rel (%p907) target = $region140
        $region139: #{tpu_custom_call.1} parent=95 // pred_region
          %911 = dma.done %s903, 4096
        $region140: #{tpu_custom_call.1} parent=95 // pred_fallthru
          _
        %s912 = sand.u32 %s49, 1
        %s913 = scalar_lea.sflag [#allocation22], %s912
        %s914 = sand.u32 %s406, 1
        %s915 = scalar_lea.vmem [#allocation21], %s914
        // Predicated region
        $region141: #{tpu_custom_call.1} parent=95 // pred_check
          %p916 = pneg %p419
        $region142: #{tpu_custom_call.1} parent=95 // pred_check_branch
          %918 = sbr.rel (%p916) target = $region144
        $region143: #{tpu_custom_call.1} parent=95 // pred_region
          %920 = dma.done %s913, 16
        $region144: #{tpu_custom_call.1} parent=95 // pred_fallthru
          _
        // Predicated region
        $region145: #{tpu_custom_call.1} parent=95 // pred_check
          %p921 = pneg %p440
        $region146: #{tpu_custom_call.1} parent=95 // pred_check_branch
          %923 = sbr.rel (%p921) target = $region148
        $region147: #{tpu_custom_call.1} parent=95 // pred_region
          %925 = dma.done [#allocation22], 1024
        $region148: #{tpu_custom_call.1} parent=95 // pred_fallthru
          _
        // Predicated region
        $region149: #{tpu_custom_call.1} parent=95 // pred_check
          %p926 = pneg %p482
        $region150: #{tpu_custom_call.1} parent=95 // pred_check_branch
          %928 = sbr.rel (%p926) target = $region152
        $region151: #{tpu_custom_call.1} parent=95 // pred_region
          %930 = dma.done [#allocation25], 1024
        $region152: #{tpu_custom_call.1} parent=95 // pred_fallthru
          _
        %p931 = pneg %p65
        %p932 = pneg %p62
        %p933 = pneg %p86
        %p934 = pneg %p83
        %p935 = pneg %p107
        %p936 = pneg %p104
        %s937 = sand.u32 %s49, 1
        %s938 = scalar_lea.sflag [#allocation10], %s937
        %s939 = sand.u32 %s120, 1
        %s940 = smul.addr %s939, 192
        %s941 = scalar_lea.vmem [#allocation9], %s940
        %p942 = pneg %p133
        %p943 = pneg %p130
        %s944 = sand.u32 %s49, 1
        %s945 = scalar_lea.sflag [#allocation10], %s944
        %s946 = sand.u32 %s146, 1
        %s947 = smul.addr %s946, 3
        %s948 = scalar_lea.vmem [#allocation11], %s947
        %p949 = pneg %p159
        %p950 = pneg %p156
        %s951 = sand.u32 %s49, 1
        %s952 = scalar_lea.sflag [#allocation13], %s951
        %s953 = sand.u32 %s172, 1
        %s954 = smul.addr %s953, 64
        %s955 = scalar_lea.vmem [#allocation12], %s954
        %p956 = pneg %p185
        %p957 = pneg %p182
        %s958 = sand.u32 %s49, 1
        %s959 = scalar_lea.sflag [#allocation13], %s958
        %s960 = sand.u32 %s198, 1
        %s961 = scalar_lea.vmem [#allocation14], %s960
        %p962 = pneg %p211
        %p963 = pneg %p208
        %s964 = sand.u32 %s49, 1
        %s965 = scalar_lea.sflag [#allocation16], %s964
        %s966 = sand.u32 %s224, 1
        %s967 = scalar_lea.vmem [#allocation15], %s966
        %p968 = pneg %p237
        %p969 = pneg %p234
        %s970 = sand.u32 %s49, 1
        %s971 = scalar_lea.sflag [#allocation16], %s970
        %s972 = sand.u32 %s250, 1
        %s973 = scalar_lea.vmem [#allocation17], %s972
        %p974 = pneg %p263
        %p975 = pneg %p260
        %s976 = sand.u32 %s49, 1
        %s977 = scalar_lea.sflag [#allocation19], %s976
        %s978 = sand.u32 %s276, 1
        %s979 = smul.addr %s978, 256
        %s980 = scalar_lea.vmem [#allocation18], %s979
        %p981 = pneg %p289
        %p982 = pneg %p286
        %p983 = scmp.lt.s32.totalorder %s49, 1
        %s984 = scalar_select %p983, %s49, 1
        %s985 = smul.addr %s984, 4
        %s986 = scalar_lea.vmem %s10, %s985
        %p987 = pneg %p315
        %p988 = pneg %p312
        %s989 = sand.u32 %s49, 1
        %s990 = scalar_lea.sflag [#allocation19], %s989
        %s991 = sand.u32 %s328, 1
        %s992 = smul.addr %s991, 256
        %s993 = scalar_lea.vmem [#allocation20], %s992
        %p994 = pneg %p341
        %p995 = pneg %p338
        %p996 = scmp.lt.s32.totalorder %s49, 1
        %s997 = scalar_select %p996, %s49, 1
        %s998 = scalar_lea.vmem %s12, %s997
        %p999 = pneg %p367
        %p1000 = pneg %p364
        %p1001 = scmp.lt.s32.totalorder %s49, 1
        %s1002 = scalar_select %p1001, %s49, 1
        %s1003 = scalar_lea.vmem %s13, %s1002
        %p1004 = pneg %p393
        %p1005 = pneg %p390
        %s1006 = sand.u32 %s49, 1
        %s1007 = scalar_lea.sflag [#allocation22], %s1006
        %s1008 = sand.u32 %s406, 1
        %s1009 = scalar_lea.vmem [#allocation21], %s1008
        %p1010 = pneg %p419
        %p1011 = pneg %p416
        %p1012 = pneg %p440
        %p1013 = pneg %p437
        %p1014 = pneg %p461
        %p1015 = pneg %p458
        %p1016 = pneg %p482
        %p1017 = pneg %p479
        %p1018 = pneg %p503
        %p1019 = pneg %p500
        %p1020 = pneg %p524
        %p1021 = pneg %p521
        %p1022 = scmp.lt.s32.totalorder %s49, 1
        %s1023 = scalar_select %p1022, %s49, 1
        %s1024 = smul.addr %s1023, 4
        %s1025 = scalar_lea.vmem %s10, %s1024
        %p1026 = scmp.lt.s32.totalorder %s49, 1
        %s1027 = scalar_select %p1026, %s49, 1
        %s1028 = scalar_lea.vmem %s12, %s1027
        %p1029 = scmp.lt.s32.totalorder %s49, 1
        %s1030 = scalar_select %p1029, %s49, 1
        %s1031 = scalar_lea.vmem %s13, %s1030
        %p1033 = scmp.eq.s32.totalorder %s49, 0
        // Predicated region
        $region153: #{tpu_custom_call.1} parent=95 // pred_check
          %p1034 = pneg %p1033
        $region154: #{tpu_custom_call.1} parent=95 // pred_check_branch
          %1036 = sbr.rel (%p1034) target = $region156
        $region155: #{tpu_custom_call.1} parent=95 // pred_region
          %v1037 = vld [vmem:[#allocation3] sm:$0xff]
          %v1038 = vld [vmem:[#allocation3 + $0x8] sm:$0xff]
          %1039 = vst [vmem:[#allocation2] sm:$0xff] %v1037
          %1040 = vst [vmem:[#allocation2 + $0x8] sm:$0xff] %v1038
        $region156: #{tpu_custom_call.1} parent=95 // pred_fallthru
          _
        %v1041 = vld [vmem:[#allocation2] sm:$0xff]
        %v1042 = vld [vmem:[#allocation2 + $0x8] sm:$0xff]
        %v1043 = vpack.c.bf16 %v1042, %v1041
        %v1044 = vld [vmem:[%s839] sm:$0xff]
        %v1045 = vld [vmem:[%s839 + $0x8] sm:$0xf]
        %v1046 = vld [vmem:[%s839 + $0xc] sm:$0xff]
        %v1047 = vld [vmem:[%s839 + $0x14] sm:$0xf]
        %v1048 = vld [vmem:[%s839 + $0x18] sm:$0xff]
        %v1049 = vld [vmem:[%s839 + $0x20] sm:$0xf]
        %v1050 = vld [vmem:[%s839 + $0x24] sm:$0xff]
        %v1051 = vld [vmem:[%s839 + $0x2c] sm:$0xf]
        %v1052 = vld [vmem:[%s839 + $0x30] sm:$0xff]
        %v1053 = vld [vmem:[%s839 + $0x38] sm:$0xf]
        %v1054 = vld [vmem:[%s839 + $0x3c] sm:$0xff]
        %v1055 = vld [vmem:[%s839 + $0x44] sm:$0xf]
        %v1056 = vld [vmem:[%s839 + $0x48] sm:$0xff]
        %v1057 = vld [vmem:[%s839 + $0x50] sm:$0xf]
        %v1058 = vld [vmem:[%s839 + $0x54] sm:$0xff]
        %v1059 = vld [vmem:[%s839 + $0x5c] sm:$0xf]
        %v1060 = vld [vmem:[%s839 + $0x60] sm:$0xff]
        %v1061 = vld [vmem:[%s839 + $0x68] sm:$0xf]
        %v1062 = vld [vmem:[%s839 + $0x6c] sm:$0xff]
        %v1063 = vld [vmem:[%s839 + $0x74] sm:$0xf]
        %v1064 = vld [vmem:[%s839 + $0x78] sm:$0xff]
        %v1065 = vld [vmem:[%s839 + $0x80] sm:$0xf]
        %v1066 = vld [vmem:[%s839 + $0x84] sm:$0xff]
        %v1067 = vld [vmem:[%s839 + $0x8c] sm:$0xf]
        %v1068 = vld [vmem:[%s839 + $0x90] sm:$0xff]
        %v1069 = vld [vmem:[%s839 + $0x98] sm:$0xf]
        %v1070 = vld [vmem:[%s839 + $0x9c] sm:$0xff]
        %v1071 = vld [vmem:[%s839 + $0xa4] sm:$0xf]
        %v1072 = vld [vmem:[%s839 + $0xa8] sm:$0xff]
        %v1073 = vld [vmem:[%s839 + $0xb0] sm:$0xf]
        %v1074 = vld [vmem:[%s839 + $0xb4] sm:$0xff]
        %v1075 = vld [vmem:[%s839 + $0xbc] sm:$0xf]
        %v1076 = vld [vmem:[%s849] sm:$0x7]
        %v1078 = vperm.slane %v1076, 0
        %v1079 = vperm.slane %v1076, 1
        %v1080 = vperm.slane %v1076, 2
        %v1116 = vunpack.c.l.b16 %v1044
        %v1117 = vunpack.c.h.b16 %v1044
        %v1118 = vunpack.c.l.b16 %v1045
        %v1119 = vunpack.c.l.b16 %v1046
        %v1120 = vunpack.c.h.b16 %v1046
        %v1121 = vunpack.c.l.b16 %v1047
        %v1122 = vunpack.c.l.b16 %v1048
        %v1123 = vunpack.c.h.b16 %v1048
        %v1124 = vunpack.c.l.b16 %v1049
        %v1125 = vunpack.c.l.b16 %v1050
        %v1126 = vunpack.c.h.b16 %v1050
        %v1127 = vunpack.c.l.b16 %v1051
        %v1128 = vunpack.c.l.b16 %v1052
        %v1129 = vunpack.c.h.b16 %v1052
        %v1130 = vunpack.c.l.b16 %v1053
        %v1131 = vunpack.c.l.b16 %v1054
        %v1132 = vunpack.c.h.b16 %v1054
        %v1133 = vunpack.c.l.b16 %v1055
        %v1134 = vunpack.c.l.b16 %v1056
        %v1135 = vunpack.c.h.b16 %v1056
        %v1136 = vunpack.c.l.b16 %v1057
        %v1137 = vunpack.c.l.b16 %v1058
        %v1138 = vunpack.c.h.b16 %v1058
        %v1139 = vunpack.c.l.b16 %v1059
        %v1140 = vunpack.c.l.b16 %v1060
        %v1141 = vunpack.c.h.b16 %v1060
        %v1142 = vunpack.c.l.b16 %v1061
        %v1143 = vunpack.c.l.b16 %v1062
        %v1144 = vunpack.c.h.b16 %v1062
        %v1145 = vunpack.c.l.b16 %v1063
        %v1146 = vunpack.c.l.b16 %v1064
        %v1147 = vunpack.c.h.b16 %v1064
        %v1148 = vunpack.c.l.b16 %v1065
        %v1149 = vunpack.c.l.b16 %v1066
        %v1150 = vunpack.c.h.b16 %v1066
        %v1151 = vunpack.c.l.b16 %v1067
        %v1152 = vunpack.c.l.b16 %v1068
        %v1153 = vunpack.c.h.b16 %v1068
        %v1154 = vunpack.c.l.b16 %v1069
        %v1155 = vunpack.c.l.b16 %v1070
        %v1156 = vunpack.c.h.b16 %v1070
        %v1157 = vunpack.c.l.b16 %v1071
        %v1158 = vunpack.c.l.b16 %v1072
        %v1159 = vunpack.c.h.b16 %v1072
        %v1160 = vunpack.c.l.b16 %v1073
        %v1161 = vunpack.c.l.b16 %v1074
        %v1162 = vunpack.c.h.b16 %v1074
        %v1163 = vunpack.c.l.b16 %v1075
        %v1164 = vpack.c.b16 %v1119, %v1116
        %v1165 = vpack.c.b16 %v1120, %v1117
        %v1166 = vpack.c.b16 %v1121, %v1118
        %v1167 = vpack.c.b16 %v1125, %v1122
        %v1168 = vpack.c.b16 %v1126, %v1123
        %v1169 = vpack.c.b16 %v1127, %v1124
        %v1170 = vpack.c.b16 %v1131, %v1128
        %v1171 = vpack.c.b16 %v1132, %v1129
        %v1172 = vpack.c.b16 %v1133, %v1130
        %v1173 = vpack.c.b16 %v1137, %v1134
        %v1174 = vpack.c.b16 %v1138, %v1135
        %v1175 = vpack.c.b16 %v1139, %v1136
        %v1176 = vpack.c.b16 %v1143, %v1140
        %v1177 = vpack.c.b16 %v1144, %v1141
        %v1178 = vpack.c.b16 %v1145, %v1142
        %v1179 = vpack.c.b16 %v1149, %v1146
        %v1180 = vpack.c.b16 %v1150, %v1147
        %v1181 = vpack.c.b16 %v1151, %v1148
        %v1182 = vpack.c.b16 %v1155, %v1152
        %v1183 = vpack.c.b16 %v1156, %v1153
        %v1184 = vpack.c.b16 %v1157, %v1154
        %v1185 = vpack.c.b16 %v1161, %v1158
        %v1186 = vpack.c.b16 %v1162, %v1159
        %v1187 = vpack.c.b16 %v1163, %v1160
        %1212 = vmatpush.bf16.msra.mxu0 %v1185
        %1213 = vmatpush.bf16.msra.mxu0 %v1182
        %1214 = vmatpush.bf16.msra.mxu0 %v1179
        %1215 = vmatpush.bf16.msra.mxu0 %v1176
        %1216 = vmatpush.bf16.msra.mxu0 %v1173
        %1217 = vmatpush.bf16.msra.mxu0 %v1170
        %1218 = vmatpush.bf16.msra.mxu0 %v1167
        %1219 = vmatpush.bf16.msra.mxu0 %v1164
        %1220 = vmatmul.bf16.gmra.mxu0 %v1043
        %v1221 = vpop.f32.mrf.mxu0
        %v1222 = vadd.f32 %v1078, %v1221
        %v1223 = vpop.f32.mrf.mxu0
        %v1224 = vadd.f32 %v1078, %v1223
        %1225 = vdwg.mxu0
        %1226 = vmatpush.bf16.msra.mxu0 %v1186
        %1227 = vmatpush.bf16.msra.mxu0 %v1183
        %1228 = vmatpush.bf16.msra.mxu0 %v1180
        %1229 = vmatpush.bf16.msra.mxu0 %v1177
        %1230 = vmatpush.bf16.msra.mxu0 %v1174
        %1231 = vmatpush.bf16.msra.mxu0 %v1171
        %1232 = vmatpush.bf16.msra.mxu0 %v1168
        %1233 = vmatpush.bf16.msra.mxu0 %v1165
        %1234 = vmatmul.bf16.gmra.mxu0 %v1043
        %v1235 = vpop.f32.mrf.mxu0
        %v1236 = vadd.f32 %v1079, %v1235
        %v1237 = vpop.f32.mrf.mxu0
        %v1238 = vadd.f32 %v1079, %v1237
        %1239 = vdwg.mxu0
        %1240 = vmatpush.bf16.msra.mxu0 %v1187
        %1241 = vmatpush.bf16.msra.mxu0 %v1184
        %1242 = vmatpush.bf16.msra.mxu0 %v1181
        %1243 = vmatpush.bf16.msra.mxu0 %v1178
        %1244 = vmatpush.bf16.msra.mxu0 %v1175
        %1245 = vmatpush.bf16.msra.mxu0 %v1172
        %1246 = vmatpush.bf16.msra.mxu0 %v1169
        %1247 = vmatpush.bf16.msra.mxu0 %v1166
        %1248 = vmatmul.bf16.gmra.mxu0 %v1043
        %v1249 = vpop.f32.mrf.mxu0
        %v1250 = vadd.f32 %v1080, %v1249
        %v1251 = vpop.f32.mrf.mxu0
        %v1252 = vadd.f32 %v1080, %v1251
        %1253 = vdwg.mxu0
        %v1254 = vld [vmem:[#allocation8] sm:$0x1]
        %v1255 = vld [vmem:[#allocation8 + $0x1] sm:$0x1]
        %v1256 = vld [vmem:[#allocation8 + $0x2] sm:$0x1]
        %v1257 = vld [vmem:[#allocation8 + $0x3] sm:$0x1]
        %v1262 = vperm.slane %v1254, 0
        %v1263 = vperm.slane %v1255, 0
        %v1264 = vperm.slane %v1256, 0
        %v1265 = vperm.slane %v1257, 0
        %v1270 = vmul.f32 %v1222, %v1262
        %v1271 = vmul.f32 %v1224, %v1262
        %v1272 = vmul.f32 %v1222, %v1263
        %v1273 = vmul.f32 %v1224, %v1263
        %v1274 = vmul.f32 %v1222, %v1264
        %v1275 = vmul.f32 %v1224, %v1264
        %v1276 = vmul.f32 %v1222, %v1265
        %v1277 = vmul.f32 %v1224, %v1265
        %v1278 = vpack.c.bf16 %v1270, %v1270
        %v1279 = vpack.c.bf16 %v1271, %v1271
        %v1280 = vpack.c.bf16 %v1272, %v1272
        %v1281 = vpack.c.bf16 %v1273, %v1273
        %v1282 = vpack.c.bf16 %v1274, %v1274
        %v1283 = vpack.c.bf16 %v1275, %v1275
        %v1284 = vpack.c.bf16 %v1276, %v1276
        %v1285 = vpack.c.bf16 %v1277, %v1277
        %v1286 = vpack.c.bf16 %v1236, %v1236
        %v1287 = vpack.c.bf16 %v1238, %v1238
        %v1288 = vmul.f32 %v1250, %v1262
        %v1289 = vmul.f32 %v1252, %v1262
        %v1290 = vmul.f32 %v1250, %v1263
        %v1291 = vmul.f32 %v1252, %v1263
        %v1292 = vmul.f32 %v1250, %v1264
        %v1293 = vmul.f32 %v1252, %v1264
        %v1294 = vmul.f32 %v1250, %v1265
        %v1295 = vmul.f32 %v1252, %v1265
        %v1296 = vpack.c.bf16 %v1288, %v1288
        %v1297 = vpack.c.bf16 %v1289, %v1289
        %v1298 = vpack.c.bf16 %v1290, %v1290
        %v1299 = vpack.c.bf16 %v1291, %v1291
        %v1300 = vpack.c.bf16 %v1292, %v1292
        %v1301 = vpack.c.bf16 %v1293, %v1293
        %v1302 = vpack.c.bf16 %v1294, %v1294
        %v1303 = vpack.c.bf16 %v1295, %v1295
        %v1304 = vld [vmem:[#allocation6] sm:$0xff]
        %v1305 = vld [vmem:[#allocation6 + $0x8] sm:$0xff]
        %v1308 = vunpack.c.l.b16 %v1278
        %v1309 = vunpack.c.l.b16 %v1279
        %v1310 = vpack.c.b16 %v1309, %v1308
        %v1314 = vunpack.c.l.b16 %v1286
        %v1315 = vunpack.c.l.b16 %v1287
        %v1316 = vpack.c.b16 %v1315, %v1314
        %1318 = vmatpush.bf16.xpose.msra.mxu0 0
        %1319 = vmatpush.bf16.xpose.msra.mxu0 0
        %1320 = vmatpush.bf16.xpose.msra.mxu0 0
        %1321 = vmatpush.bf16.xpose.msra.mxu0 0
        %1322 = vmatpush.bf16.xpose.msra.mxu0 0
        %1323 = vmatpush.bf16.xpose.msra.mxu0 0
        %1324 = vmatpush.bf16.xpose.msra.mxu0 0
        %1325 = vmatpush.bf16.xpose.msra.mxu0 %v1316
        %1326 = vmatmul.bf16.gmra.mxu0 %v1310
        %v1327 = vpop.f32.mrf.mxu0
        %v1328 = vadd.f32 %v1304, %v1327
        %v1329 = vpop.f32.mrf.mxu0
        %v1330 = vadd.f32 %v1305, %v1329
        %1331 = vdwg.mxu0
        %v1334 = vunpack.c.l.b16 %v1280
        %v1335 = vunpack.c.l.b16 %v1281
        %v1336 = vpack.c.b16 %v1335, %v1334
        %1338 = vmatpush.bf16.xpose.msra.mxu0 0
        %1339 = vmatpush.bf16.xpose.msra.mxu0 0
        %1340 = vmatpush.bf16.xpose.msra.mxu0 0
        %1341 = vmatpush.bf16.xpose.msra.mxu0 0
        %1342 = vmatpush.bf16.xpose.msra.mxu0 0
        %1343 = vmatpush.bf16.xpose.msra.mxu0 0
        %1344 = vmatpush.bf16.xpose.msra.mxu0 0
        %1345 = vmatpush.bf16.xpose.msra.mxu0 %v1316
        %1346 = vmatmul.bf16.gmra.mxu0 %v1336
        %v1347 = vpop.f32.mrf.mxu0
        %v1348 = vadd.f32 %v1304, %v1347
        %v1349 = vpop.f32.mrf.mxu0
        %v1350 = vadd.f32 %v1305, %v1349
        %1351 = vdwg.mxu0
        %v1354 = vunpack.c.l.b16 %v1282
        %v1355 = vunpack.c.l.b16 %v1283
        %v1356 = vpack.c.b16 %v1355, %v1354
        %1358 = vmatpush.bf16.xpose.msra.mxu0 0
        %1359 = vmatpush.bf16.xpose.msra.mxu0 0
        %1360 = vmatpush.bf16.xpose.msra.mxu0 0
        %1361 = vmatpush.bf16.xpose.msra.mxu0 0
        %1362 = vmatpush.bf16.xpose.msra.mxu0 0
        %1363 = vmatpush.bf16.xpose.msra.mxu0 0
        %1364 = vmatpush.bf16.xpose.msra.mxu0 0
        %1365 = vmatpush.bf16.xpose.msra.mxu0 %v1316
        %1366 = vmatmul.bf16.gmra.mxu0 %v1356
        %v1367 = vpop.f32.mrf.mxu0
        %v1368 = vadd.f32 %v1304, %v1367
        %v1369 = vpop.f32.mrf.mxu0
        %v1370 = vadd.f32 %v1305, %v1369
        %1371 = vdwg.mxu0
        %v1374 = vunpack.c.l.b16 %v1284
        %v1375 = vunpack.c.l.b16 %v1285
        %v1376 = vpack.c.b16 %v1375, %v1374
        %1378 = vmatpush.bf16.xpose.msra.mxu0 0
        %1379 = vmatpush.bf16.xpose.msra.mxu0 0
        %1380 = vmatpush.bf16.xpose.msra.mxu0 0
        %1381 = vmatpush.bf16.xpose.msra.mxu0 0
        %1382 = vmatpush.bf16.xpose.msra.mxu0 0
        %1383 = vmatpush.bf16.xpose.msra.mxu0 0
        %1384 = vmatpush.bf16.xpose.msra.mxu0 0
        %1385 = vmatpush.bf16.xpose.msra.mxu0 %v1316
        %1386 = vmatmul.bf16.gmra.mxu0 %v1376
        %v1387 = vpop.f32.mrf.mxu0
        %v1388 = vadd.f32 %v1304, %v1387
        %v1389 = vpop.f32.mrf.mxu0
        %v1390 = vadd.f32 %v1305, %v1389
        %1391 = vdwg.mxu0
        %vm1392 = vcmask 130048
        %v1393 = vsel %vm1392, %v1328, -inf
        %1394 = vmax.xlane.f32.xlu0 %v1393
        %v1395 = vpop.xlane.xlu0 %1394
        %v1396 = vsel %vm1392, %v1330, -inf
        %1397 = vmax.xlane.f32.xlu0 %v1396
        %v1398 = vpop.xlane.xlu0 %1397
        %v1399 = vsel %vm1392, %v1348, -inf
        %1400 = vmax.xlane.f32.xlu0 %v1399
        %v1401 = vpop.xlane.xlu0 %1400
        %v1402 = vsel %vm1392, %v1350, -inf
        %1403 = vmax.xlane.f32.xlu0 %v1402
        %v1404 = vpop.xlane.xlu0 %1403
        %v1405 = vsel %vm1392, %v1368, -inf
        %1406 = vmax.xlane.f32.xlu0 %v1405
        %v1407 = vpop.xlane.xlu0 %1406
        %v1408 = vsel %vm1392, %v1370, -inf
        %1409 = vmax.xlane.f32.xlu0 %v1408
        %v1410 = vpop.xlane.xlu0 %1409
        %v1411 = vsel %vm1392, %v1388, -inf
        %1412 = vmax.xlane.f32.xlu0 %v1411
        %v1413 = vpop.xlane.xlu0 %1412
        %v1414 = vsel %vm1392, %v1390, -inf
        %1415 = vmax.xlane.f32.xlu0 %v1414
        %v1416 = vpop.xlane.xlu0 %1415
        %v1417 = vsub.f32 %v1328, %v1395
        %v1418 = vsub.f32 %v1330, %v1398
        %v1419 = vsub.f32 %v1348, %v1401
        %v1420 = vsub.f32 %v1350, %v1404
        %v1421 = vsub.f32 %v1368, %v1407
        %v1422 = vsub.f32 %v1370, %v1410
        %v1423 = vsub.f32 %v1388, %v1413
        %v1424 = vsub.f32 %v1390, %v1416
        %v1425 = vmul.f32 %v1417, 1.442695
        %v1426 = vpow.pop %v1425
        %v1427 = vmul.f32 %v1418, 1.442695
        %v1428 = vpow.pop %v1427
        %v1429 = vmul.f32 %v1419, 1.442695
        %v1430 = vpow.pop %v1429
        %v1431 = vmul.f32 %v1420, 1.442695
        %v1432 = vpow.pop %v1431
        %v1433 = vmul.f32 %v1421, 1.442695
        %v1434 = vpow.pop %v1433
        %v1435 = vmul.f32 %v1422, 1.442695
        %v1436 = vpow.pop %v1435
        %v1437 = vmul.f32 %v1423, 1.442695
        %v1438 = vpow.pop %v1437
        %v1439 = vmul.f32 %v1424, 1.442695
        %v1440 = vpow.pop %v1439
        %v1441 = vsel %vm1392, %v1426, 0.0
        %1442 = vadd.xlane.f32.xlu0 %v1441
        %v1443 = vpop.xlane.xlu0 %1442
        %v1444 = vsel %vm1392, %v1428, 0.0
        %1445 = vadd.xlane.f32.xlu0 %v1444
        %v1446 = vpop.xlane.xlu0 %1445
        %v1447 = vsel %vm1392, %v1430, 0.0
        %1448 = vadd.xlane.f32.xlu0 %v1447
        %v1449 = vpop.xlane.xlu0 %1448
        %v1450 = vsel %vm1392, %v1432, 0.0
        %1451 = vadd.xlane.f32.xlu0 %v1450
        %v1452 = vpop.xlane.xlu0 %1451
        %v1453 = vsel %vm1392, %v1434, 0.0
        %1454 = vadd.xlane.f32.xlu0 %v1453
        %v1455 = vpop.xlane.xlu0 %1454
        %v1456 = vsel %vm1392, %v1436, 0.0
        %1457 = vadd.xlane.f32.xlu0 %v1456
        %v1458 = vpop.xlane.xlu0 %1457
        %v1459 = vsel %vm1392, %v1438, 0.0
        %1460 = vadd.xlane.f32.xlu0 %v1459
        %v1461 = vpop.xlane.xlu0 %1460
        %v1462 = vsel %vm1392, %v1440, 0.0
        %1463 = vadd.xlane.f32.xlu0 %v1462
        %v1464 = vpop.xlane.xlu0 %1463
        %v1465 = vrcp.pop %v1443
        %v1466 = vrcp.pop %v1446
        %v1467 = vrcp.pop %v1449
        %v1468 = vrcp.pop %v1452
        %v1469 = vrcp.pop %v1455
        %v1470 = vrcp.pop %v1458
        %v1471 = vrcp.pop %v1461
        %v1472 = vrcp.pop %v1464
        %v1473 = vmul.f32 %v1426, %v1465
        %v1474 = vmul.f32 %v1428, %v1466
        %v1475 = vmul.f32 %v1430, %v1467
        %v1476 = vmul.f32 %v1432, %v1468
        %v1477 = vmul.f32 %v1434, %v1469
        %v1478 = vmul.f32 %v1436, %v1470
        %v1479 = vmul.f32 %v1438, %v1471
        %v1480 = vmul.f32 %v1440, %v1472
        %v1481 = vpack.c.bf16 %v1473, %v1473
        %v1482 = vpack.c.bf16 %v1474, %v1474
        %v1483 = vpack.c.bf16 %v1475, %v1475
        %v1484 = vpack.c.bf16 %v1476, %v1476
        %v1485 = vpack.c.bf16 %v1477, %v1477
        %v1486 = vpack.c.bf16 %v1478, %v1478
        %v1487 = vpack.c.bf16 %v1479, %v1479
        %v1488 = vpack.c.bf16 %v1480, %v1480
        %v1491 = vunpack.c.l.b16 %v1481
        %v1492 = vunpack.c.l.b16 %v1482
        %v1493 = vpack.c.b16 %v1492, %v1491
        %v1496 = vunpack.c.l.b16 %v1296
        %v1497 = vunpack.c.l.b16 %v1297
        %v1498 = vpack.c.b16 %v1497, %v1496
        %v1501 = vsel %vm1392, %v1493, 0
        %1503 = vmatpush.bf16.msra.mxu0 0
        %1504 = vmatpush.bf16.msra.mxu0 0
        %1505 = vmatpush.bf16.msra.mxu0 0
        %1506 = vmatpush.bf16.msra.mxu0 0
        %1507 = vmatpush.bf16.msra.mxu0 0
        %1508 = vmatpush.bf16.msra.mxu0 0
        %1509 = vmatpush.bf16.msra.mxu0 0
        %1510 = vmatpush.bf16.msra.mxu0 %v1498
        %1511 = vmatmul.bf16.gmra.mxu0 %v1501
        %v1512 = vpop.f32.mrf.mxu0
        %v1513 = vadd.f32 0.0, %v1512
        %v1514 = vpop.f32.mrf.mxu0
        %v1515 = vadd.f32 0.0, %v1514
        %1516 = vdwg.mxu0
        %v1519 = vunpack.c.l.b16 %v1483
        %v1520 = vunpack.c.l.b16 %v1484
        %v1521 = vpack.c.b16 %v1520, %v1519
        %v1524 = vunpack.c.l.b16 %v1298
        %v1525 = vunpack.c.l.b16 %v1299
        %v1526 = vpack.c.b16 %v1525, %v1524
        %v1529 = vsel %vm1392, %v1521, 0
        %1531 = vmatpush.bf16.msra.mxu0 0
        %1532 = vmatpush.bf16.msra.mxu0 0
        %1533 = vmatpush.bf16.msra.mxu0 0
        %1534 = vmatpush.bf16.msra.mxu0 0
        %1535 = vmatpush.bf16.msra.mxu0 0
        %1536 = vmatpush.bf16.msra.mxu0 0
        %1537 = vmatpush.bf16.msra.mxu0 0
        %1538 = vmatpush.bf16.msra.mxu0 %v1526
        %1539 = vmatmul.bf16.gmra.mxu0 %v1529
        %v1540 = vpop.f32.mrf.mxu0
        %v1541 = vadd.f32 0.0, %v1540
        %v1542 = vpop.f32.mrf.mxu0
        %v1543 = vadd.f32 0.0, %v1542
        %1544 = vdwg.mxu0
        %v1547 = vunpack.c.l.b16 %v1485
        %v1548 = vunpack.c.l.b16 %v1486
        %v1549 = vpack.c.b16 %v1548, %v1547
        %v1552 = vunpack.c.l.b16 %v1300
        %v1553 = vunpack.c.l.b16 %v1301
        %v1554 = vpack.c.b16 %v1553, %v1552
        %v1557 = vsel %vm1392, %v1549, 0
        %1559 = vmatpush.bf16.msra.mxu0 0
        %1560 = vmatpush.bf16.msra.mxu0 0
        %1561 = vmatpush.bf16.msra.mxu0 0
        %1562 = vmatpush.bf16.msra.mxu0 0
        %1563 = vmatpush.bf16.msra.mxu0 0
        %1564 = vmatpush.bf16.msra.mxu0 0
        %1565 = vmatpush.bf16.msra.mxu0 0
        %1566 = vmatpush.bf16.msra.mxu0 %v1554
        %1567 = vmatmul.bf16.gmra.mxu0 %v1557
        %v1568 = vpop.f32.mrf.mxu0
        %v1569 = vadd.f32 0.0, %v1568
        %v1570 = vpop.f32.mrf.mxu0
        %v1571 = vadd.f32 0.0, %v1570
        %1572 = vdwg.mxu0
        %v1575 = vunpack.c.l.b16 %v1487
        %v1576 = vunpack.c.l.b16 %v1488
        %v1577 = vpack.c.b16 %v1576, %v1575
        %v1580 = vunpack.c.l.b16 %v1302
        %v1581 = vunpack.c.l.b16 %v1303
        %v1582 = vpack.c.b16 %v1581, %v1580
        %v1585 = vsel %vm1392, %v1577, 0
        %1587 = vmatpush.bf16.msra.mxu0 0
        %1588 = vmatpush.bf16.msra.mxu0 0
        %1589 = vmatpush.bf16.msra.mxu0 0
        %1590 = vmatpush.bf16.msra.mxu0 0
        %1591 = vmatpush.bf16.msra.mxu0 0
        %1592 = vmatpush.bf16.msra.mxu0 0
        %1593 = vmatpush.bf16.msra.mxu0 0
        %1594 = vmatpush.bf16.msra.mxu0 %v1582
        %1595 = vmatmul.bf16.gmra.mxu0 %v1585
        %v1596 = vpop.f32.mrf.mxu0
        %v1597 = vadd.f32 0.0, %v1596
        %v1598 = vpop.f32.mrf.mxu0
        %v1599 = vadd.f32 0.0, %v1598
        %1600 = vdwg.mxu0
        %v1601 = vadd.f32 %v1513, %v1541
        %v1602 = vadd.f32 %v1515, %v1543
        %v1603 = vadd.f32 %v1601, %v1569
        %v1604 = vadd.f32 %v1602, %v1571
        %v1605 = vadd.f32 %v1603, %v1597
        %v1606 = vadd.f32 %v1604, %v1599
        %v1607 = vpack.c.bf16 %v1606, %v1605
        %v1608 = vld [vmem:[%s859] sm:$0xf]
        %v1609 = vld [vmem:[%s859 + $0x4] sm:$0xf]
        %v1610 = vld [vmem:[%s859 + $0x8] sm:$0xf]
        %v1611 = vld [vmem:[%s859 + $0xc] sm:$0xf]
        %v1612 = vld [vmem:[%s859 + $0x10] sm:$0xf]
        %v1613 = vld [vmem:[%s859 + $0x14] sm:$0xf]
        %v1614 = vld [vmem:[%s859 + $0x18] sm:$0xf]
        %v1615 = vld [vmem:[%s859 + $0x1c] sm:$0xf]
        %v1616 = vld [vmem:[%s859 + $0x20] sm:$0xf]
        %v1617 = vld [vmem:[%s859 + $0x24] sm:$0xf]
        %v1618 = vld [vmem:[%s859 + $0x28] sm:$0xf]
        %v1619 = vld [vmem:[%s859 + $0x2c] sm:$0xf]
        %v1620 = vld [vmem:[%s859 + $0x30] sm:$0xf]
        %v1621 = vld [vmem:[%s859 + $0x34] sm:$0xf]
        %v1622 = vld [vmem:[%s859 + $0x38] sm:$0xf]
        %v1623 = vld [vmem:[%s859 + $0x3c] sm:$0xf]
        %v1624 = vld [vmem:[%s868] sm:$0x1]
        %v1626 = vperm.slane %v1624, 0
        %v1644 = vunpack.c.l.b16 %v1608
        %v1645 = vunpack.c.l.b16 %v1609
        %v1646 = vunpack.c.l.b16 %v1610
        %v1647 = vunpack.c.l.b16 %v1611
        %v1648 = vunpack.c.l.b16 %v1612
        %v1649 = vunpack.c.l.b16 %v1613
        %v1650 = vunpack.c.l.b16 %v1614
        %v1651 = vunpack.c.l.b16 %v1615
        %v1652 = vunpack.c.l.b16 %v1616
        %v1653 = vunpack.c.l.b16 %v1617
        %v1654 = vunpack.c.l.b16 %v1618
        %v1655 = vunpack.c.l.b16 %v1619
        %v1656 = vunpack.c.l.b16 %v1620
        %v1657 = vunpack.c.l.b16 %v1621
        %v1658 = vunpack.c.l.b16 %v1622
        %v1659 = vunpack.c.l.b16 %v1623
        %v1660 = vpack.c.b16 %v1645, %v1644
        %v1661 = vpack.c.b16 %v1647, %v1646
        %v1662 = vpack.c.b16 %v1649, %v1648
        %v1663 = vpack.c.b16 %v1651, %v1650
        %v1664 = vpack.c.b16 %v1653, %v1652
        %v1665 = vpack.c.b16 %v1655, %v1654
        %v1666 = vpack.c.b16 %v1657, %v1656
        %v1667 = vpack.c.b16 %v1659, %v1658
        %1676 = vmatpush.bf16.msra.mxu0 %v1667
        %1677 = vmatpush.bf16.msra.mxu0 %v1666
        %1678 = vmatpush.bf16.msra.mxu0 %v1665
        %1679 = vmatpush.bf16.msra.mxu0 %v1664
        %1680 = vmatpush.bf16.msra.mxu0 %v1663
        %1681 = vmatpush.bf16.msra.mxu0 %v1662
        %1682 = vmatpush.bf16.msra.mxu0 %v1661
        %1683 = vmatpush.bf16.msra.mxu0 %v1660
        %1684 = vmatmul.bf16.gmra.mxu0 %v1607
        %v1685 = vpop.f32.mrf.mxu0
        %v1686 = vadd.f32 %v1626, %v1685
        %v1687 = vpop.f32.mrf.mxu0
        %v1688 = vadd.f32 %v1626, %v1687
        %1689 = vdwg.mxu0
        %v1690 = vadd.f32 %v1041, %v1686
        %v1691 = vadd.f32 %v1042, %v1688
        %v1692 = vld [vmem:[%s877] sm:$0x1]
        %v1693 = vld [vmem:[%s886] sm:$0x1]
        %1694 = vadd.xlane.f32.xlu0 %v1690
        %v1695 = vpop.xlane.xlu0 %1694
        %1696 = vadd.xlane.f32.xlu0 %v1691
        %v1697 = vpop.xlane.xlu0 %1696
        %v1698 = vrcp.pop 128.0
        %v1699 = vmul.f32 128.0, %v1698
        %v1700 = vsub.f32 1.0, %v1699
        %v1701 = vmul.f32 %v1698, %v1700
        %v1702 = vadd.f32 %v1698, %v1701
        %vm1703 = vweird.f32 %v1698
        %v1704 = vsel %vm1703, %v1698, %v1702
        %v1705 = vmul.f32 %v1695, %v1704
        %v1706 = vmul.f32 %v1697, %v1704
        %v1707 = vsub.f32 %v1690, %v1705
        %v1708 = vsub.f32 %v1691, %v1706
        %v1709 = vmul.f32 %v1707, %v1707
        %v1710 = vmul.f32 %v1708, %v1708
        %1711 = vadd.xlane.f32.xlu0 %v1709
        %v1712 = vpop.xlane.xlu0 %1711
        %1713 = vadd.xlane.f32.xlu0 %v1710
        %v1714 = vpop.xlane.xlu0 %1713
        %v1715 = vmul.f32 %v1712, %v1704
        %v1716 = vmul.f32 %v1714, %v1704
        %v1717 = vadd.f32 %v1715, 1e-12
        %v1718 = vadd.f32 %v1716, 1e-12
        %v1719 = vrsqrt.pop %v1717
        %v1720 = vmul.f32 %v1719, %v1717
        %v1721 = vmul.f32 %v1720, %v1719
        %v1722 = vmul.f32 0.5, %v1721
        %v1723 = vsub.f32 1.5, %v1722
        %v1724 = vmul.f32 %v1719, %v1723
        %vm1725 = vweird.f32 %v1717
        %vm1726 = vweird.f32 %v1719
        %vm1727 = vmor %vm1725, %vm1726
        %v1728 = vsel %vm1727, %v1719, %v1724
        %v1729 = vrsqrt.pop %v1718
        %v1730 = vmul.f32 %v1729, %v1718
        %v1731 = vmul.f32 %v1730, %v1729
        %v1732 = vmul.f32 0.5, %v1731
        %v1733 = vsub.f32 1.5, %v1732
        %v1734 = vmul.f32 %v1729, %v1733
        %vm1735 = vweird.f32 %v1718
        %vm1736 = vweird.f32 %v1729
        %vm1737 = vmor %vm1735, %vm1736
        %v1738 = vsel %vm1737, %v1729, %v1734
        %v1739 = vmul.f32 %v1707, %v1728
        %v1740 = vmul.f32 %v1708, %v1738
        %v1742 = vperm.slane %v1692, 0
        %v1744 = vmul.f32 %v1739, %v1742
        %v1745 = vmul.f32 %v1740, %v1742
        %v1747 = vperm.slane %v1693, 0
        %v1749 = vadd.f32 %v1744, %v1747
        %v1750 = vadd.f32 %v1745, %v1747
        %v1751 = vpack.c.bf16 %v1750, %v1749
        %v1752 = vld [vmem:[%s896] sm:$0xff]
        %v1753 = vld [vmem:[%s896 + $0x8] sm:$0xff]
        %v1754 = vld [vmem:[%s896 + $0x10] sm:$0xff]
        %v1755 = vld [vmem:[%s896 + $0x18] sm:$0xff]
        %v1756 = vld [vmem:[%s896 + $0x20] sm:$0xff]
        %v1757 = vld [vmem:[%s896 + $0x28] sm:$0xff]
        %v1758 = vld [vmem:[%s896 + $0x30] sm:$0xff]
        %v1759 = vld [vmem:[%s896 + $0x38] sm:$0xff]
        %v1760 = vld [vmem:[%s896 + $0x40] sm:$0xff]
        %v1761 = vld [vmem:[%s896 + $0x48] sm:$0xff]
        %v1762 = vld [vmem:[%s896 + $0x50] sm:$0xff]
        %v1763 = vld [vmem:[%s896 + $0x58] sm:$0xff]
        %v1764 = vld [vmem:[%s896 + $0x60] sm:$0xff]
        %v1765 = vld [vmem:[%s896 + $0x68] sm:$0xff]
        %v1766 = vld [vmem:[%s896 + $0x70] sm:$0xff]
        %v1767 = vld [vmem:[%s896 + $0x78] sm:$0xff]
        %v1768 = vld [vmem:[%s896 + $0x80] sm:$0xff]
        %v1769 = vld [vmem:[%s896 + $0x88] sm:$0xff]
        %v1770 = vld [vmem:[%s896 + $0x90] sm:$0xff]
        %v1771 = vld [vmem:[%s896 + $0x98] sm:$0xff]
        %v1772 = vld [vmem:[%s896 + $0xa0] sm:$0xff]
        %v1773 = vld [vmem:[%s896 + $0xa8] sm:$0xff]
        %v1774 = vld [vmem:[%s896 + $0xb0] sm:$0xff]
        %v1775 = vld [vmem:[%s896 + $0xb8] sm:$0xff]
        %v1776 = vld [vmem:[%s896 + $0xc0] sm:$0xff]
        %v1777 = vld [vmem:[%s896 + $0xc8] sm:$0xff]
        %v1778 = vld [vmem:[%s896 + $0xd0] sm:$0xff]
        %v1779 = vld [vmem:[%s896 + $0xd8] sm:$0xff]
        %v1780 = vld [vmem:[%s896 + $0xe0] sm:$0xff]
        %v1781 = vld [vmem:[%s896 + $0xe8] sm:$0xff]
        %v1782 = vld [vmem:[%s896 + $0xf0] sm:$0xff]
        %v1783 = vld [vmem:[%s896 + $0xf8] sm:$0xff]
        %v1784 = vld [vmem:[%s1025] sm:$0xf]
        %v1786 = vperm.slane %v1784, 0
        %v1787 = vperm.slane %v1784, 1
        %v1788 = vperm.slane %v1784, 2
        %v1789 = vperm.slane %v1784, 3
        %v1826 = vunpack.c.l.b16 %v1752
        %v1827 = vunpack.c.h.b16 %v1752
        %v1828 = vunpack.c.l.b16 %v1753
        %v1829 = vunpack.c.h.b16 %v1753
        %v1830 = vunpack.c.l.b16 %v1754
        %v1831 = vunpack.c.h.b16 %v1754
        %v1832 = vunpack.c.l.b16 %v1755
        %v1833 = vunpack.c.h.b16 %v1755
        %v1834 = vunpack.c.l.b16 %v1756
        %v1835 = vunpack.c.h.b16 %v1756
        %v1836 = vunpack.c.l.b16 %v1757
        %v1837 = vunpack.c.h.b16 %v1757
        %v1838 = vunpack.c.l.b16 %v1758
        %v1839 = vunpack.c.h.b16 %v1758
        %v1840 = vunpack.c.l.b16 %v1759
        %v1841 = vunpack.c.h.b16 %v1759
        %v1842 = vunpack.c.l.b16 %v1760
        %v1843 = vunpack.c.h.b16 %v1760
        %v1844 = vunpack.c.l.b16 %v1761
        %v1845 = vunpack.c.h.b16 %v1761
        %v1846 = vunpack.c.l.b16 %v1762
        %v1847 = vunpack.c.h.b16 %v1762
        %v1848 = vunpack.c.l.b16 %v1763
        %v1849 = vunpack.c.h.b16 %v1763
        %v1850 = vunpack.c.l.b16 %v1764
        %v1851 = vunpack.c.h.b16 %v1764
        %v1852 = vunpack.c.l.b16 %v1765
        %v1853 = vunpack.c.h.b16 %v1765
        %v1854 = vunpack.c.l.b16 %v1766
        %v1855 = vunpack.c.h.b16 %v1766
        %v1856 = vunpack.c.l.b16 %v1767
        %v1857 = vunpack.c.h.b16 %v1767
        %v1858 = vunpack.c.l.b16 %v1768
        %v1859 = vunpack.c.h.b16 %v1768
        %v1860 = vunpack.c.l.b16 %v1769
        %v1861 = vunpack.c.h.b16 %v1769
        %v1862 = vunpack.c.l.b16 %v1770
        %v1863 = vunpack.c.h.b16 %v1770
        %v1864 = vunpack.c.l.b16 %v1771
        %v1865 = vunpack.c.h.b16 %v1771
        %v1866 = vunpack.c.l.b16 %v1772
        %v1867 = vunpack.c.h.b16 %v1772
        %v1868 = vunpack.c.l.b16 %v1773
        %v1869 = vunpack.c.h.b16 %v1773
        %v1870 = vunpack.c.l.b16 %v1774
        %v1871 = vunpack.c.h.b16 %v1774
        %v1872 = vunpack.c.l.b16 %v1775
        %v1873 = vunpack.c.h.b16 %v1775
        %v1874 = vunpack.c.l.b16 %v1776
        %v1875 = vunpack.c.h.b16 %v1776
        %v1876 = vunpack.c.l.b16 %v1777
        %v1877 = vunpack.c.h.b16 %v1777
        %v1878 = vunpack.c.l.b16 %v1778
        %v1879 = vunpack.c.h.b16 %v1778
        %v1880 = vunpack.c.l.b16 %v1779
        %v1881 = vunpack.c.h.b16 %v1779
        %v1882 = vunpack.c.l.b16 %v1780
        %v1883 = vunpack.c.h.b16 %v1780
        %v1884 = vunpack.c.l.b16 %v1781
        %v1885 = vunpack.c.h.b16 %v1781
        %v1886 = vunpack.c.l.b16 %v1782
        %v1887 = vunpack.c.h.b16 %v1782
        %v1888 = vunpack.c.l.b16 %v1783
        %v1889 = vunpack.c.h.b16 %v1783
        %v1890 = vpack.c.b16 %v1830, %v1826
        %v1891 = vpack.c.b16 %v1831, %v1827
        %v1892 = vpack.c.b16 %v1832, %v1828
        %v1893 = vpack.c.b16 %v1833, %v1829
        %v1894 = vpack.c.b16 %v1838, %v1834
        %v1895 = vpack.c.b16 %v1839, %v1835
        %v1896 = vpack.c.b16 %v1840, %v1836
        %v1897 = vpack.c.b16 %v1841, %v1837
        %v1898 = vpack.c.b16 %v1846, %v1842
        %v1899 = vpack.c.b16 %v1847, %v1843
        %v1900 = vpack.c.b16 %v1848, %v1844
        %v1901 = vpack.c.b16 %v1849, %v1845
        %v1902 = vpack.c.b16 %v1854, %v1850
        %v1903 = vpack.c.b16 %v1855, %v1851
        %v1904 = vpack.c.b16 %v1856, %v1852
        %v1905 = vpack.c.b16 %v1857, %v1853
        %v1906 = vpack.c.b16 %v1862, %v1858
        %v1907 = vpack.c.b16 %v1863, %v1859
        %v1908 = vpack.c.b16 %v1864, %v1860
        %v1909 = vpack.c.b16 %v1865, %v1861
        %v1910 = vpack.c.b16 %v1870, %v1866
        %v1911 = vpack.c.b16 %v1871, %v1867
        %v1912 = vpack.c.b16 %v1872, %v1868
        %v1913 = vpack.c.b16 %v1873, %v1869
        %v1914 = vpack.c.b16 %v1878, %v1874
        %v1915 = vpack.c.b16 %v1879, %v1875
        %v1916 = vpack.c.b16 %v1880, %v1876
        %v1917 = vpack.c.b16 %v1881, %v1877
        %v1918 = vpack.c.b16 %v1886, %v1882
        %v1919 = vpack.c.b16 %v1887, %v1883
        %v1920 = vpack.c.b16 %v1888, %v1884
        %v1921 = vpack.c.b16 %v1889, %v1885
        %1954 = vmatpush.bf16.msra.mxu0 %v1918
        %1955 = vmatpush.bf16.msra.mxu0 %v1914
        %1956 = vmatpush.bf16.msra.mxu0 %v1910
        %1957 = vmatpush.bf16.msra.mxu0 %v1906
        %1958 = vmatpush.bf16.msra.mxu0 %v1902
        %1959 = vmatpush.bf16.msra.mxu0 %v1898
        %1960 = vmatpush.bf16.msra.mxu0 %v1894
        %1961 = vmatpush.bf16.msra.mxu0 %v1890
        %1962 = vmatmul.bf16.gmra.mxu0 %v1751
        %v1963 = vpop.f32.mrf.mxu0
        %v1964 = vadd.f32 %v1786, %v1963
        %v1965 = vpop.f32.mrf.mxu0
        %v1966 = vadd.f32 %v1786, %v1965
        %1967 = vdwg.mxu0
        %1968 = vmatpush.bf16.msra.mxu0 %v1919
        %1969 = vmatpush.bf16.msra.mxu0 %v1915
        %1970 = vmatpush.bf16.msra.mxu0 %v1911
        %1971 = vmatpush.bf16.msra.mxu0 %v1907
        %1972 = vmatpush.bf16.msra.mxu0 %v1903
        %1973 = vmatpush.bf16.msra.mxu0 %v1899
        %1974 = vmatpush.bf16.msra.mxu0 %v1895
        %1975 = vmatpush.bf16.msra.mxu0 %v1891
        %1976 = vmatmul.bf16.gmra.mxu0 %v1751
        %v1977 = vpop.f32.mrf.mxu0
        %v1978 = vadd.f32 %v1787, %v1977
        %v1979 = vpop.f32.mrf.mxu0
        %v1980 = vadd.f32 %v1787, %v1979
        %1981 = vdwg.mxu0
        %1982 = vmatpush.bf16.msra.mxu0 %v1920
        %1983 = vmatpush.bf16.msra.mxu0 %v1916
        %1984 = vmatpush.bf16.msra.mxu0 %v1912
        %1985 = vmatpush.bf16.msra.mxu0 %v1908
        %1986 = vmatpush.bf16.msra.mxu0 %v1904
        %1987 = vmatpush.bf16.msra.mxu0 %v1900
        %1988 = vmatpush.bf16.msra.mxu0 %v1896
        %1989 = vmatpush.bf16.msra.mxu0 %v1892
        %1990 = vmatmul.bf16.gmra.mxu0 %v1751
        %v1991 = vpop.f32.mrf.mxu0
        %v1992 = vadd.f32 %v1788, %v1991
        %v1993 = vpop.f32.mrf.mxu0
        %v1994 = vadd.f32 %v1788, %v1993
        %1995 = vdwg.mxu0
        %1996 = vmatpush.bf16.msra.mxu0 %v1921
        %1997 = vmatpush.bf16.msra.mxu0 %v1917
        %1998 = vmatpush.bf16.msra.mxu0 %v1913
        %1999 = vmatpush.bf16.msra.mxu0 %v1909
        %2000 = vmatpush.bf16.msra.mxu0 %v1905
        %2001 = vmatpush.bf16.msra.mxu0 %v1901
        %2002 = vmatpush.bf16.msra.mxu0 %v1897
        %2003 = vmatpush.bf16.msra.mxu0 %v1893
        %2004 = vmatmul.bf16.gmra.mxu0 %v1751
        %v2005 = vpop.f32.mrf.mxu0
        %v2006 = vadd.f32 %v1789, %v2005
        %v2007 = vpop.f32.mrf.mxu0
        %v2008 = vadd.f32 %v1789, %v2007
        %2009 = vdwg.mxu0
        %v2010 = vmul.f32 %v1964, %v1964
        %v2011 = vmul.f32 %v1978, %v1978
        %v2012 = vmul.f32 %v1992, %v1992
        %v2013 = vmul.f32 %v2006, %v2006
        %v2014 = vmul.f32 %v1966, %v1966
        %v2015 = vmul.f32 %v1980, %v1980
        %v2016 = vmul.f32 %v1994, %v1994
        %v2017 = vmul.f32 %v2008, %v2008
        %v2018 = vmul.f32 %v1964, %v2010
        %v2019 = vmul.f32 %v1978, %v2011
        %v2020 = vmul.f32 %v1992, %v2012
        %v2021 = vmul.f32 %v2006, %v2013
        %v2022 = vmul.f32 %v1966, %v2014
        %v2023 = vmul.f32 %v1980, %v2015
        %v2024 = vmul.f32 %v1994, %v2016
        %v2025 = vmul.f32 %v2008, %v2017
        %v2026 = vmul.f32 %v2018, 0.044715
        %v2027 = vmul.f32 %v2019, 0.044715
        %v2028 = vmul.f32 %v2020, 0.044715
        %v2029 = vmul.f32 %v2021, 0.044715
        %v2030 = vmul.f32 %v2022, 0.044715
        %v2031 = vmul.f32 %v2023, 0.044715
        %v2032 = vmul.f32 %v2024, 0.044715
        %v2033 = vmul.f32 %v2025, 0.044715
        %v2034 = vadd.f32 %v1964, %v2026
        %v2035 = vadd.f32 %v1978, %v2027
        %v2036 = vadd.f32 %v1992, %v2028
        %v2037 = vadd.f32 %v2006, %v2029
        %v2038 = vadd.f32 %v1966, %v2030
        %v2039 = vadd.f32 %v1980, %v2031
        %v2040 = vadd.f32 %v1994, %v2032
        %v2041 = vadd.f32 %v2008, %v2033
        %v2042 = vmul.f32 %v2034, 0.7978846
        %v2043 = vmul.f32 %v2035, 0.7978846
        %v2044 = vmul.f32 %v2036, 0.7978846
        %v2045 = vmul.f32 %v2037, 0.7978846
        %v2046 = vmul.f32 %v2038, 0.7978846
        %v2047 = vmul.f32 %v2039, 0.7978846
        %v2048 = vmul.f32 %v2040, 0.7978846
        %v2049 = vmul.f32 %v2041, 0.7978846
        %v2050 = vtanh.pop %v2042
        %v2051 = vtanh.pop %v2043
        %v2052 = vtanh.pop %v2044
        %v2053 = vtanh.pop %v2045
        %v2054 = vtanh.pop %v2046
        %v2055 = vtanh.pop %v2047
        %v2056 = vtanh.pop %v2048
        %v2057 = vtanh.pop %v2049
        %v2058 = vadd.f32 %v2050, 1.0
        %v2059 = vadd.f32 %v2051, 1.0
        %v2060 = vadd.f32 %v2052, 1.0
        %v2061 = vadd.f32 %v2053, 1.0
        %v2062 = vadd.f32 %v2054, 1.0
        %v2063 = vadd.f32 %v2055, 1.0
        %v2064 = vadd.f32 %v2056, 1.0
        %v2065 = vadd.f32 %v2057, 1.0
        %v2066 = vmul.f32 %v2058, 0.5
        %v2067 = vmul.f32 %v2059, 0.5
        %v2068 = vmul.f32 %v2060, 0.5
        %v2069 = vmul.f32 %v2061, 0.5
        %v2070 = vmul.f32 %v2062, 0.5
        %v2071 = vmul.f32 %v2063, 0.5
        %v2072 = vmul.f32 %v2064, 0.5
        %v2073 = vmul.f32 %v2065, 0.5
        %v2074 = vmul.f32 %v1964, %v2066
        %v2075 = vmul.f32 %v1978, %v2067
        %v2076 = vmul.f32 %v1992, %v2068
        %v2077 = vmul.f32 %v2006, %v2069
        %v2078 = vmul.f32 %v1966, %v2070
        %v2079 = vmul.f32 %v1980, %v2071
        %v2080 = vmul.f32 %v1994, %v2072
        %v2081 = vmul.f32 %v2008, %v2073
        %v2082 = vpack.c.bf16 %v2078, %v2074
        %v2083 = vpack.c.bf16 %v2079, %v2075
        %v2084 = vpack.c.bf16 %v2080, %v2076
        %v2085 = vpack.c.bf16 %v2081, %v2077
        %v2086 = vld [vmem:[%s906] sm:$0xf]
        %v2087 = vld [vmem:[%s906 + $0x4] sm:$0xf]
        %v2088 = vld [vmem:[%s906 + $0x8] sm:$0xf]
        %v2089 = vld [vmem:[%s906 + $0xc] sm:$0xf]
        %v2090 = vld [vmem:[%s906 + $0x10] sm:$0xf]
        %v2091 = vld [vmem:[%s906 + $0x14] sm:$0xf]
        %v2092 = vld [vmem:[%s906 + $0x18] sm:$0xf]
        %v2093 = vld [vmem:[%s906 + $0x1c] sm:$0xf]
        %v2094 = vld [vmem:[%s906 + $0x20] sm:$0xf]
        %v2095 = vld [vmem:[%s906 + $0x24] sm:$0xf]
        %v2096 = vld [vmem:[%s906 + $0x28] sm:$0xf]
        %v2097 = vld [vmem:[%s906 + $0x2c] sm:$0xf]
        %v2098 = vld [vmem:[%s906 + $0x30] sm:$0xf]
        %v2099 = vld [vmem:[%s906 + $0x34] sm:$0xf]
        %v2100 = vld [vmem:[%s906 + $0x38] sm:$0xf]
        %v2101 = vld [vmem:[%s906 + $0x3c] sm:$0xf]
        %v2102 = vld [vmem:[%s906 + $0x40] sm:$0xf]
        %v2103 = vld [vmem:[%s906 + $0x44] sm:$0xf]
        %v2104 = vld [vmem:[%s906 + $0x48] sm:$0xf]
        %v2105 = vld [vmem:[%s906 + $0x4c] sm:$0xf]
        %v2106 = vld [vmem:[%s906 + $0x50] sm:$0xf]
        %v2107 = vld [vmem:[%s906 + $0x54] sm:$0xf]
        %v2108 = vld [vmem:[%s906 + $0x58] sm:$0xf]
        %v2109 = vld [vmem:[%s906 + $0x5c] sm:$0xf]
        %v2110 = vld [vmem:[%s906 + $0x60] sm:$0xf]
        %v2111 = vld [vmem:[%s906 + $0x64] sm:$0xf]
        %v2112 = vld [vmem:[%s906 + $0x68] sm:$0xf]
        %v2113 = vld [vmem:[%s906 + $0x6c] sm:$0xf]
        %v2114 = vld [vmem:[%s906 + $0x70] sm:$0xf]
        %v2115 = vld [vmem:[%s906 + $0x74] sm:$0xf]
        %v2116 = vld [vmem:[%s906 + $0x78] sm:$0xf]
        %v2117 = vld [vmem:[%s906 + $0x7c] sm:$0xf]
        %v2118 = vld [vmem:[%s906 + $0x80] sm:$0xf]
        %v2119 = vld [vmem:[%s906 + $0x84] sm:$0xf]
        %v2120 = vld [vmem:[%s906 + $0x88] sm:$0xf]
        %v2121 = vld [vmem:[%s906 + $0x8c] sm:$0xf]
        %v2122 = vld [vmem:[%s906 + $0x90] sm:$0xf]
        %v2123 = vld [vmem:[%s906 + $0x94] sm:$0xf]
        %v2124 = vld [vmem:[%s906 + $0x98] sm:$0xf]
        %v2125 = vld [vmem:[%s906 + $0x9c] sm:$0xf]
        %v2126 = vld [vmem:[%s906 + $0xa0] sm:$0xf]
        %v2127 = vld [vmem:[%s906 + $0xa4] sm:$0xf]
        %v2128 = vld [vmem:[%s906 + $0xa8] sm:$0xf]
        %v2129 = vld [vmem:[%s906 + $0xac] sm:$0xf]
        %v2130 = vld [vmem:[%s906 + $0xb0] sm:$0xf]
        %v2131 = vld [vmem:[%s906 + $0xb4] sm:$0xf]
        %v2132 = vld [vmem:[%s906 + $0xb8] sm:$0xf]
        %v2133 = vld [vmem:[%s906 + $0xbc] sm:$0xf]
        %v2134 = vld [vmem:[%s906 + $0xc0] sm:$0xf]
        %v2135 = vld [vmem:[%s906 + $0xc4] sm:$0xf]
        %v2136 = vld [vmem:[%s906 + $0xc8] sm:$0xf]
        %v2137 = vld [vmem:[%s906 + $0xcc] sm:$0xf]
        %v2138 = vld [vmem:[%s906 + $0xd0] sm:$0xf]
        %v2139 = vld [vmem:[%s906 + $0xd4] sm:$0xf]
        %v2140 = vld [vmem:[%s906 + $0xd8] sm:$0xf]
        %v2141 = vld [vmem:[%s906 + $0xdc] sm:$0xf]
        %v2142 = vld [vmem:[%s906 + $0xe0] sm:$0xf]
        %v2143 = vld [vmem:[%s906 + $0xe4] sm:$0xf]
        %v2144 = vld [vmem:[%s906 + $0xe8] sm:$0xf]
        %v2145 = vld [vmem:[%s906 + $0xec] sm:$0xf]
        %v2146 = vld [vmem:[%s906 + $0xf0] sm:$0xf]
        %v2147 = vld [vmem:[%s906 + $0xf4] sm:$0xf]
        %v2148 = vld [vmem:[%s906 + $0xf8] sm:$0xf]
        %v2149 = vld [vmem:[%s906 + $0xfc] sm:$0xf]
        %v2150 = vld [vmem:[%s1028] sm:$0x1]
        %v2152 = vperm.slane %v2150, 0
        %v2218 = vunpack.c.l.b16 %v2086
        %v2219 = vunpack.c.l.b16 %v2087
        %v2220 = vunpack.c.l.b16 %v2088
        %v2221 = vunpack.c.l.b16 %v2089
        %v2222 = vunpack.c.l.b16 %v2090
        %v2223 = vunpack.c.l.b16 %v2091
        %v2224 = vunpack.c.l.b16 %v2092
        %v2225 = vunpack.c.l.b16 %v2093
        %v2226 = vunpack.c.l.b16 %v2094
        %v2227 = vunpack.c.l.b16 %v2095
        %v2228 = vunpack.c.l.b16 %v2096
        %v2229 = vunpack.c.l.b16 %v2097
        %v2230 = vunpack.c.l.b16 %v2098
        %v2231 = vunpack.c.l.b16 %v2099
        %v2232 = vunpack.c.l.b16 %v2100
        %v2233 = vunpack.c.l.b16 %v2101
        %v2234 = vunpack.c.l.b16 %v2102
        %v2235 = vunpack.c.l.b16 %v2103
        %v2236 = vunpack.c.l.b16 %v2104
        %v2237 = vunpack.c.l.b16 %v2105
        %v2238 = vunpack.c.l.b16 %v2106
        %v2239 = vunpack.c.l.b16 %v2107
        %v2240 = vunpack.c.l.b16 %v2108
        %v2241 = vunpack.c.l.b16 %v2109
        %v2242 = vunpack.c.l.b16 %v2110
        %v2243 = vunpack.c.l.b16 %v2111
        %v2244 = vunpack.c.l.b16 %v2112
        %v2245 = vunpack.c.l.b16 %v2113
        %v2246 = vunpack.c.l.b16 %v2114
        %v2247 = vunpack.c.l.b16 %v2115
        %v2248 = vunpack.c.l.b16 %v2116
        %v2249 = vunpack.c.l.b16 %v2117
        %v2250 = vunpack.c.l.b16 %v2118
        %v2251 = vunpack.c.l.b16 %v2119
        %v2252 = vunpack.c.l.b16 %v2120
        %v2253 = vunpack.c.l.b16 %v2121
        %v2254 = vunpack.c.l.b16 %v2122
        %v2255 = vunpack.c.l.b16 %v2123
        %v2256 = vunpack.c.l.b16 %v2124
        %v2257 = vunpack.c.l.b16 %v2125
        %v2258 = vunpack.c.l.b16 %v2126
        %v2259 = vunpack.c.l.b16 %v2127
        %v2260 = vunpack.c.l.b16 %v2128
        %v2261 = vunpack.c.l.b16 %v2129
        %v2262 = vunpack.c.l.b16 %v2130
        %v2263 = vunpack.c.l.b16 %v2131
        %v2264 = vunpack.c.l.b16 %v2132
        %v2265 = vunpack.c.l.b16 %v2133
        %v2266 = vunpack.c.l.b16 %v2134
        %v2267 = vunpack.c.l.b16 %v2135
        %v2268 = vunpack.c.l.b16 %v2136
        %v2269 = vunpack.c.l.b16 %v2137
        %v2270 = vunpack.c.l.b16 %v2138
        %v2271 = vunpack.c.l.b16 %v2139
        %v2272 = vunpack.c.l.b16 %v2140
        %v2273 = vunpack.c.l.b16 %v2141
        %v2274 = vunpack.c.l.b16 %v2142
        %v2275 = vunpack.c.l.b16 %v2143
        %v2276 = vunpack.c.l.b16 %v2144
        %v2277 = vunpack.c.l.b16 %v2145
        %v2278 = vunpack.c.l.b16 %v2146
        %v2279 = vunpack.c.l.b16 %v2147
        %v2280 = vunpack.c.l.b16 %v2148
        %v2281 = vunpack.c.l.b16 %v2149
        %v2282 = vpack.c.b16 %v2219, %v2218
        %v2283 = vpack.c.b16 %v2221, %v2220
        %v2284 = vpack.c.b16 %v2223, %v2222
        %v2285 = vpack.c.b16 %v2225, %v2224
        %v2286 = vpack.c.b16 %v2227, %v2226
        %v2287 = vpack.c.b16 %v2229, %v2228
        %v2288 = vpack.c.b16 %v2231, %v2230
        %v2289 = vpack.c.b16 %v2233, %v2232
        %v2290 = vpack.c.b16 %v2235, %v2234
        %v2291 = vpack.c.b16 %v2237, %v2236
        %v2292 = vpack.c.b16 %v2239, %v2238
        %v2293 = vpack.c.b16 %v2241, %v2240
        %v2294 = vpack.c.b16 %v2243, %v2242
        %v2295 = vpack.c.b16 %v2245, %v2244
        %v2296 = vpack.c.b16 %v2247, %v2246
        %v2297 = vpack.c.b16 %v2249, %v2248
        %v2298 = vpack.c.b16 %v2251, %v2250
        %v2299 = vpack.c.b16 %v2253, %v2252
        %v2300 = vpack.c.b16 %v2255, %v2254
        %v2301 = vpack.c.b16 %v2257, %v2256
        %v2302 = vpack.c.b16 %v2259, %v2258
        %v2303 = vpack.c.b16 %v2261, %v2260
        %v2304 = vpack.c.b16 %v2263, %v2262
        %v2305 = vpack.c.b16 %v2265, %v2264
        %v2306 = vpack.c.b16 %v2267, %v2266
        %v2307 = vpack.c.b16 %v2269, %v2268
        %v2308 = vpack.c.b16 %v2271, %v2270
        %v2309 = vpack.c.b16 %v2273, %v2272
        %v2310 = vpack.c.b16 %v2275, %v2274
        %v2311 = vpack.c.b16 %v2277, %v2276
        %v2312 = vpack.c.b16 %v2279, %v2278
        %v2313 = vpack.c.b16 %v2281, %v2280
        %2346 = vmatpush.bf16.msra.mxu0 %v2289
        %2347 = vmatpush.bf16.msra.mxu0 %v2288
        %2348 = vmatpush.bf16.msra.mxu0 %v2287
        %2349 = vmatpush.bf16.msra.mxu0 %v2286
        %2350 = vmatpush.bf16.msra.mxu0 %v2285
        %2351 = vmatpush.bf16.msra.mxu0 %v2284
        %2352 = vmatpush.bf16.msra.mxu0 %v2283
        %2353 = vmatpush.bf16.msra.mxu0 %v2282
        %2354 = vmatmul.bf16.gmra.mxu0 %v2082
        %v2355 = vpop.f32.mrf.mxu0
        %v2356 = vadd.f32 %v2152, %v2355
        %v2357 = vpop.f32.mrf.mxu0
        %v2358 = vadd.f32 %v2152, %v2357
        %2359 = vdwg.mxu0
        %2360 = vmatpush.bf16.msra.mxu0 %v2297
        %2361 = vmatpush.bf16.msra.mxu0 %v2296
        %2362 = vmatpush.bf16.msra.mxu0 %v2295
        %2363 = vmatpush.bf16.msra.mxu0 %v2294
        %2364 = vmatpush.bf16.msra.mxu0 %v2293
        %2365 = vmatpush.bf16.msra.mxu0 %v2292
        %2366 = vmatpush.bf16.msra.mxu0 %v2291
        %2367 = vmatpush.bf16.msra.mxu0 %v2290
        %2368 = vmatmul.bf16.gmra.mxu0 %v2083
        %v2369 = vpop.f32.mrf.mxu0
        %v2370 = vadd.f32 %v2356, %v2369
        %v2371 = vpop.f32.mrf.mxu0
        %v2372 = vadd.f32 %v2358, %v2371
        %2373 = vdwg.mxu0
        %2374 = vmatpush.bf16.msra.mxu0 %v2305
        %2375 = vmatpush.bf16.msra.mxu0 %v2304
        %2376 = vmatpush.bf16.msra.mxu0 %v2303
        %2377 = vmatpush.bf16.msra.mxu0 %v2302
        %2378 = vmatpush.bf16.msra.mxu0 %v2301
        %2379 = vmatpush.bf16.msra.mxu0 %v2300
        %2380 = vmatpush.bf16.msra.mxu0 %v2299
        %2381 = vmatpush.bf16.msra.mxu0 %v2298
        %2382 = vmatmul.bf16.gmra.mxu0 %v2084
        %v2383 = vpop.f32.mrf.mxu0
        %v2384 = vadd.f32 %v2370, %v2383
        %v2385 = vpop.f32.mrf.mxu0
        %v2386 = vadd.f32 %v2372, %v2385
        %2387 = vdwg.mxu0
        %2388 = vmatpush.bf16.msra.mxu0 %v2313
        %2389 = vmatpush.bf16.msra.mxu0 %v2312
        %2390 = vmatpush.bf16.msra.mxu0 %v2311
        %2391 = vmatpush.bf16.msra.mxu0 %v2310
        %2392 = vmatpush.bf16.msra.mxu0 %v2309
        %2393 = vmatpush.bf16.msra.mxu0 %v2308
        %2394 = vmatpush.bf16.msra.mxu0 %v2307
        %2395 = vmatpush.bf16.msra.mxu0 %v2306
        %2396 = vmatmul.bf16.gmra.mxu0 %v2085
        %v2397 = vpop.f32.mrf.mxu0
        %v2398 = vadd.f32 %v2384, %v2397
        %v2399 = vpop.f32.mrf.mxu0
        %v2400 = vadd.f32 %v2386, %v2399
        %2401 = vdwg.mxu0
        %v2402 = vadd.f32 %v1749, %v2398
        %v2403 = vadd.f32 %v1750, %v2400
        %v2404 = vld [vmem:[%s1031] sm:$0x1]
        %v2405 = vld [vmem:[%s915] sm:$0x1]
        %2406 = vadd.xlane.f32.xlu0 %v2402
        %v2407 = vpop.xlane.xlu0 %2406
        %2408 = vadd.xlane.f32.xlu0 %v2403
        %v2409 = vpop.xlane.xlu0 %2408
        %v2410 = vmul.f32 %v2407, %v1704
        %v2411 = vmul.f32 %v2409, %v1704
        %v2412 = vsub.f32 %v2402, %v2410
        %v2413 = vsub.f32 %v2403, %v2411
        %v2414 = vmul.f32 %v2412, %v2412
        %v2415 = vmul.f32 %v2413, %v2413
        %2416 = vadd.xlane.f32.xlu0 %v2414
        %v2417 = vpop.xlane.xlu0 %2416
        %2418 = vadd.xlane.f32.xlu0 %v2415
        %v2419 = vpop.xlane.xlu0 %2418
        %v2420 = vmul.f32 %v2417, %v1704
        %v2421 = vmul.f32 %v2419, %v1704
        %v2422 = vadd.f32 %v2420, 1e-12
        %v2423 = vadd.f32 %v2421, 1e-12
        %v2424 = vrsqrt.pop %v2422
        %v2425 = vmul.f32 %v2424, %v2422
        %v2426 = vmul.f32 %v2425, %v2424
        %v2427 = vmul.f32 0.5, %v2426
        %v2428 = vsub.f32 1.5, %v2427
        %v2429 = vmul.f32 %v2424, %v2428
        %vm2430 = vweird.f32 %v2422
        %vm2431 = vweird.f32 %v2424
        %vm2432 = vmor %vm2430, %vm2431
        %v2433 = vsel %vm2432, %v2424, %v2429
        %v2434 = vrsqrt.pop %v2423
        %v2435 = vmul.f32 %v2434, %v2423
        %v2436 = vmul.f32 %v2435, %v2434
        %v2437 = vmul.f32 0.5, %v2436
        %v2438 = vsub.f32 1.5, %v2437
        %v2439 = vmul.f32 %v2434, %v2438
        %vm2440 = vweird.f32 %v2423
        %vm2441 = vweird.f32 %v2434
        %vm2442 = vmor %vm2440, %vm2441
        %v2443 = vsel %vm2442, %v2434, %v2439
        %v2444 = vmul.f32 %v2412, %v2433
        %v2445 = vmul.f32 %v2413, %v2443
        %v2447 = vperm.slane %v2404, 0
        %v2449 = vmul.f32 %v2444, %v2447
        %v2450 = vmul.f32 %v2445, %v2447
        %v2452 = vperm.slane %v2405, 0
        %v2454 = vadd.f32 %v2449, %v2452
        %v2455 = vadd.f32 %v2450, %v2452
        %2456 = vst [vmem:[#allocation2] sm:$0xff] %v2454
        %2457 = vst [vmem:[#allocation2 + $0x8] sm:$0xff] %v2455
        %p2458 = scmp.eq.s32.totalorder %s49, 1
        // Predicated region
        $region157: #{tpu_custom_call.1} parent=95 // pred_check
          %p2459 = pneg %p2458
        $region158: #{tpu_custom_call.1} parent=95 // pred_check_branch
          %2461 = sbr.rel (%p2459) target = $region160
        $region159: #{tpu_custom_call.1} parent=95 // pred_region
          %v2462 = vpack.c.bf16 %v2454, %v2454
          %v2463 = vpack.c.bf16 %v2455, %v2455
          %v2464 = vld [vmem:[#allocation23] sm:$0xf]
          %v2465 = vld [vmem:[#allocation23 + $0x4] sm:$0xf]
          %v2466 = vld [vmem:[#allocation23 + $0x8] sm:$0xf]
          %v2467 = vld [vmem:[#allocation23 + $0xc] sm:$0xf]
          %v2468 = vld [vmem:[#allocation23 + $0x10] sm:$0xf]
          %v2469 = vld [vmem:[#allocation23 + $0x14] sm:$0xf]
          %v2470 = vld [vmem:[#allocation23 + $0x18] sm:$0xf]
          %v2471 = vld [vmem:[#allocation23 + $0x1c] sm:$0xf]
          %v2472 = vld [vmem:[#allocation23 + $0x20] sm:$0xf]
          %v2473 = vld [vmem:[#allocation23 + $0x24] sm:$0xf]
          %v2474 = vld [vmem:[#allocation23 + $0x28] sm:$0xf]
          %v2475 = vld [vmem:[#allocation23 + $0x2c] sm:$0xf]
          %v2476 = vld [vmem:[#allocation23 + $0x30] sm:$0xf]
          %v2477 = vld [vmem:[#allocation23 + $0x34] sm:$0xf]
          %v2478 = vld [vmem:[#allocation23 + $0x38] sm:$0xf]
          %v2479 = vld [vmem:[#allocation23 + $0x3c] sm:$0xf]
          %v2480 = vld [vmem:[%s16] sm:$0x1]
          %v2482 = vperm.slane %v2480, 0
          %v2486 = vunpack.c.l.b16 %v2462
          %v2487 = vunpack.c.l.b16 %v2463
          %v2488 = vrot.slane %v2487, 7
          %vm2489 = vcmask 1041409
          %v2490 = vsel %vm2489, %v2488, %v2486
          %v2491 = vpack.c.b16 %v2490, %v2490
          %v2509 = vunpack.c.l.b16 %v2464
          %v2510 = vunpack.c.l.b16 %v2465
          %v2511 = vunpack.c.l.b16 %v2466
          %v2512 = vunpack.c.l.b16 %v2467
          %v2513 = vunpack.c.l.b16 %v2468
          %v2514 = vunpack.c.l.b16 %v2469
          %v2515 = vunpack.c.l.b16 %v2470
          %v2516 = vunpack.c.l.b16 %v2471
          %v2517 = vunpack.c.l.b16 %v2472
          %v2518 = vunpack.c.l.b16 %v2473
          %v2519 = vunpack.c.l.b16 %v2474
          %v2520 = vunpack.c.l.b16 %v2475
          %v2521 = vunpack.c.l.b16 %v2476
          %v2522 = vunpack.c.l.b16 %v2477
          %v2523 = vunpack.c.l.b16 %v2478
          %v2524 = vunpack.c.l.b16 %v2479
          %v2525 = vpack.c.b16 %v2510, %v2509
          %v2526 = vpack.c.b16 %v2512, %v2511
          %v2527 = vpack.c.b16 %v2514, %v2513
          %v2528 = vpack.c.b16 %v2516, %v2515
          %v2529 = vpack.c.b16 %v2518, %v2517
          %v2530 = vpack.c.b16 %v2520, %v2519
          %v2531 = vpack.c.b16 %v2522, %v2521
          %v2532 = vpack.c.b16 %v2524, %v2523
          %2541 = vmatpush.bf16.msra.mxu0 %v2532
          %2542 = vmatpush.bf16.msra.mxu0 %v2531
          %2543 = vmatpush.bf16.msra.mxu0 %v2530
          %2544 = vmatpush.bf16.msra.mxu0 %v2529
          %2545 = vmatpush.bf16.msra.mxu0 %v2528
          %2546 = vmatpush.bf16.msra.mxu0 %v2527
          %2547 = vmatpush.bf16.msra.mxu0 %v2526
          %2548 = vmatpush.bf16.msra.mxu0 %v2525
          %2549 = vmatmul.bf16.gmra.mxu0 %v2491
          %v2550 = vpop.f32.mrf.mxu0
          %v2551 = vadd.f32 %v2482, %v2550
          %v2552 = vpop.f32.mrf.mxu0
          %2553 = vdwg.mxu0
          %v2554 = vmax.f32 %v2551, 0.0
          %v2555 = vpack.c.bf16 %v2554, %v2554
          %v2556 = vld [vmem:[#allocation24] sm:$0xf]
          %v2557 = vld [vmem:[#allocation24 + $0x4] sm:$0xf]
          %v2558 = vld [vmem:[#allocation24 + $0x8] sm:$0xf]
          %v2559 = vld [vmem:[#allocation24 + $0xc] sm:$0xf]
          %v2560 = vld [vmem:[#allocation24 + $0x10] sm:$0xf]
          %v2561 = vld [vmem:[#allocation24 + $0x14] sm:$0xf]
          %v2562 = vld [vmem:[#allocation24 + $0x18] sm:$0xf]
          %v2563 = vld [vmem:[#allocation24 + $0x1c] sm:$0xf]
          %v2564 = vld [vmem:[#allocation24 + $0x20] sm:$0xf]
          %v2565 = vld [vmem:[#allocation24 + $0x24] sm:$0xf]
          %v2566 = vld [vmem:[#allocation24 + $0x28] sm:$0xf]
          %v2567 = vld [vmem:[#allocation24 + $0x2c] sm:$0xf]
          %v2568 = vld [vmem:[#allocation24 + $0x30] sm:$0xf]
          %v2569 = vld [vmem:[#allocation24 + $0x34] sm:$0xf]
          %v2570 = vld [vmem:[#allocation24 + $0x38] sm:$0xf]
          %v2571 = vld [vmem:[#allocation24 + $0x3c] sm:$0xf]
          %v2572 = vld [vmem:[%s18] sm:$0x1]
          %v2574 = vperm.slane %v2572, 0
          %v2592 = vunpack.c.l.b16 %v2556
          %v2593 = vunpack.c.l.b16 %v2557
          %v2594 = vunpack.c.l.b16 %v2558
          %v2595 = vunpack.c.l.b16 %v2559
          %v2596 = vunpack.c.l.b16 %v2560
          %v2597 = vunpack.c.l.b16 %v2561
          %v2598 = vunpack.c.l.b16 %v2562
          %v2599 = vunpack.c.l.b16 %v2563
          %v2600 = vunpack.c.l.b16 %v2564
          %v2601 = vunpack.c.l.b16 %v2565
          %v2602 = vunpack.c.l.b16 %v2566
          %v2603 = vunpack.c.l.b16 %v2567
          %v2604 = vunpack.c.l.b16 %v2568
          %v2605 = vunpack.c.l.b16 %v2569
          %v2606 = vunpack.c.l.b16 %v2570
          %v2607 = vunpack.c.l.b16 %v2571
          %v2608 = vpack.c.b16 %v2593, %v2592
          %v2609 = vpack.c.b16 %v2595, %v2594
          %v2610 = vpack.c.b16 %v2597, %v2596
          %v2611 = vpack.c.b16 %v2599, %v2598
          %v2612 = vpack.c.b16 %v2601, %v2600
          %v2613 = vpack.c.b16 %v2603, %v2602
          %v2614 = vpack.c.b16 %v2605, %v2604
          %v2615 = vpack.c.b16 %v2607, %v2606
          %2624 = vmatpush.bf16.msra.mxu0 %v2615
          %2625 = vmatpush.bf16.msra.mxu0 %v2614
          %2626 = vmatpush.bf16.msra.mxu0 %v2613
          %2627 = vmatpush.bf16.msra.mxu0 %v2612
          %2628 = vmatpush.bf16.msra.mxu0 %v2611
          %2629 = vmatpush.bf16.msra.mxu0 %v2610
          %2630 = vmatpush.bf16.msra.mxu0 %v2609
          %2631 = vmatpush.bf16.msra.mxu0 %v2608
          %2632 = vmatmul.bf16.gmra.mxu0 %v2555
          %v2633 = vpop.f32.mrf.mxu0
          %v2634 = vadd.f32 %v2574, %v2633
          %v2635 = vpop.f32.mrf.mxu0
          %2636 = vdwg.mxu0
          %2637 = vst [vmem:[#allocation26] sm:$0x3] %v2634
        $region160: #{tpu_custom_call.1} parent=95 // pred_fallthru
          _
        // Predicated region
        $region161: #{tpu_custom_call.1} parent=95 // pred_check
          %p2638 = pneg %p521
        $region162: #{tpu_custom_call.1} parent=95 // pred_check_branch
          %2640 = sbr.rel (%p2638) target = $region164
        $region163: #{tpu_custom_call.1} parent=95 // pred_region
          %2642 = vsyncadd [#allocation5], 0
          %s2644 = sshll.u32 [#allocation26], 4
          %s2645 = int_to_ptr.vmem [resolvable:$true] %s2644
          %s2646 = sshll.u32 %s19, 4
          %s2647 = int_to_ptr.hbm [resolvable:$true] %s2646
          %2649 = dma.vmem_to_hbm [thread:$0]  %s2645, 32, %s2647, [#allocation5]
        $region164: #{tpu_custom_call.1} parent=95 // pred_fallthru
          _
        // Predicated region
        $region165: #{tpu_custom_call.1} parent=95 // pred_check
          %p2650 = pneg %p521
        $region166: #{tpu_custom_call.1} parent=95 // pred_check_branch
          %2652 = sbr.rel (%p2650) target = $region168
        $region167: #{tpu_custom_call.1} parent=95 // pred_region
          %2654 = dma.done [#allocation5], 32
        $region168: #{tpu_custom_call.1} parent=95 // pred_fallthru
          _
      $region96: #{tpu_custom_call.1} parent=5 // pred_fallthru
        _
      %p2655 = scmp.le.s32.totalorder 2, %s44
      // Predicated region
      $region169: #{tpu_custom_call.1} parent=5 // pred_check
        %p2656 = pneg %p2655
      $region170: #{tpu_custom_call.1} parent=5 // pred_check_branch
        %2658 = sbr.rel (%p2656) target = $region172
      $region171: #{tpu_custom_call.1} parent=5 // pred_region
        %s2659 = ssub.s32 %s44, 2
      $region172: #{tpu_custom_call.1} parent=5 // pred_fallthru
        _
    $region6: #{tpu_custom_call.1} parent=1 // loop_footer
      %s48 = sadd.s32 1, %s44
    $region7: #{tpu_custom_call.1} parent=1 // loop_footer_branch
      %43 = sbr.rel target = $region3
    $region8: #{tpu_custom_call.1} parent=1 // loop_exit
      _
    %2660 = vsyncpa [#allocation4], 1
    %s2661 = scalar_lea.sflag [#allocation4], 1
    %2662 = vsyncpa %s2661, 1
    %2663 = vsyncpa [#allocation7], 1
    %2664 = vsyncpa [#allocation10], 1
    %s2665 = scalar_lea.sflag [#allocation10], 1
    %2666 = vsyncpa %s2665, 1
    %2667 = vsyncpa [#allocation13], 1
    %s2668 = scalar_lea.sflag [#allocation13], 1
    %2669 = vsyncpa %s2668, 1
    %2670 = vsyncpa [#allocation16], 1
    %s2671 = scalar_lea.sflag [#allocation16], 1
    %2672 = vsyncpa %s2671, 1
    %2673 = vsyncpa [#allocation19], 1
    %s2674 = scalar_lea.sflag [#allocation19], 1
    %2675 = vsyncpa %s2674, 1
    %2676 = vsyncpa [#allocation22], 1
    %s2677 = scalar_lea.sflag [#allocation22], 1
    %2678 = vsyncpa %s2677, 1
    %2679 = vsyncpa [#allocation25], 1
    %2680 = vsyncpa [#allocation5], 1
    %s2681 = scalar_lea.sflag [#allocation5], 1
    %2682 = vsyncpa %s2681, 1

</llo_original>
